<compile_context>
chip_gen: v7x
topology: tpu7x:2x2x1
jax: 0.10.0
libtpu: 0.0.40
codegen_flags: <defaults>
</compile_context>

<pallas_src>
import jax
import jax.numpy as jnp
import numpy as np
from jax.experimental import pallas as pl
from jax.experimental.pallas import tpu as pltpu


def _round_up(x, m):
    return ((x + m - 1) // m) * m


def _apply_single_attention_kernel(v_ref, q_ref, att_ref,
                                   wv_ref, bv_ref, wq_ref, bq_ref, wa_ref, ba_ref,
                                   out_ref):
    """One grid step = TB batch elements.
    v_ref:(TB*O, Dv)  q_ref:(TB*L, Dq)  att_ref:(TB, L, O)  out_ref:(TB, M)."""
    TB, L, O = att_ref.shape
    M = out_ref.shape[-1]

    # lin_v / lin_q: lane-dense 2-D MXU matmuls; bf16 operands, f32 accumulation.
    v_lin = jnp.dot(v_ref[...].astype(jnp.bfloat16), wv_ref[...].astype(jnp.bfloat16),
                    preferred_element_type=jnp.float32) + bv_ref[...]      # (TB*O, M) f32
    v_lin = jnp.maximum(v_lin, 0.0)
    q_lin = jnp.dot(q_ref[...].astype(jnp.bfloat16), wq_ref[...].astype(jnp.bfloat16),
                    preferred_element_type=jnp.float32) + bq_ref[...]      # (TB*L, M) f32
    q_lin = jnp.maximum(q_lin, 0.0)

    # O and L are padded to multiples of 8 in the wrapper, so these reshapes are layout-free
    # sublane relabelings (no VMEM copy).
    v_lin = v_lin.reshape(TB, O, M)
    q_lin = q_lin.reshape(TB, L, M)

    att = att_ref[...]                                                     # (TB, L, O) f32

    # h[b,m] = sum_{l,o} atten[b,l,o] * v_lin[b,o,m] * q_lin[b,l,m]
    # Pick the contraction order with the smaller (TB, min(L, O), M) intermediate.
    if O <= L:
        att_t = jnp.swapaxes(att, 1, 2).astype(jnp.bfloat16)               # (TB, O, L), XLU
        d = jnp.einsum('bol,blm->bom', att_t, q_lin.astype(jnp.bfloat16),
                       preferred_element_type=jnp.float32)                 # (TB, O, M)
        h = jnp.sum(d * v_lin, axis=1)                                     # (TB, M) f32
    else:
        c = jnp.einsum('blo,bom->blm', att.astype(jnp.bfloat16),
                       v_lin.astype(jnp.bfloat16),
                       preferred_element_type=jnp.float32)                 # (TB, L, M)
        h = jnp.sum(c * q_lin, axis=1)                                     # (TB, M) f32

    # lin_atten (no activation), TB rows at once amortizing the (M, M) weight pass.
    out_ref[...] = (jnp.dot(h.astype(jnp.bfloat16), wa_ref[...].astype(jnp.bfloat16),
                            preferred_element_type=jnp.float32) + ba_ref[...])


def apply_single_attention_pallas(v, q, atten, params, *, block_batch=8):
    B, O, Dv = v.shape
    _, L, Dq = q.shape
    aB, aL, a1, aO = atten.shape
    assert aB == B and aL == L and a1 == 1 and aO == O, (
        "literal ApplySingleAttention forward requires atten of shape (B, que_len, 1, num_obj)")
    M = params["wv"].shape[-1]

    # Batch tile: multiple of 8 so the (tb, M) output block is sublane-aligned and the final
    # matmul has >= 8 LHS rows.  For production B raise block_batch so tb*O_p >= ~512 rows.
    tb = max(8, _round_up(block_batch, 8))
    B_p = _round_up(B, tb)
    O_p = _round_up(O, 8)
    L_p = _round_up(L, 8)
    Dv_p = _round_up(Dv, 128)
    Dq_p = _round_up(Dq, 128)
    M_p = _round_up(M, 128)

    def pad(x, shape):
        return jnp.pad(x.astype(jnp.float32),
                       [(0, s - d) for d, s in zip(x.shape, shape)])

    # Host-side (XLA) layout plumbing: zero-pad to TPU-friendly sizes and flatten batch into
    # the sublane axis so the linear layers are plain 2-D matmuls inside the kernel.
    v_p = pad(v, (B_p, O_p, Dv_p)).reshape(B_p * O_p, Dv_p)
    q_p = pad(q, (B_p, L_p, Dq_p)).reshape(B_p * L_p, Dq_p)
    att_p = pad(atten[:, :, 0, :], (B_p, L_p, O_p))

    wv = pad(params["wv"], (Dv_p, M_p)); bv = pad(params["bv"], (1, M_p))
    wq = pad(params["wq"], (Dq_p, M_p)); bq = pad(params["bq"], (1, M_p))
    wa = pad(params["wa"], (M_p, M_p)); ba = pad(params["ba"], (1, M_p))

    n_steps = B_p // tb

    # Rough per-step VMEM footprint (weights + double-buffered activation blocks +
    # intermediates) -> explicit scoped-VMEM limit with headroom, clamped for v7x (64 MiB).
    bytes_w = 4 * (Dv_p * M_p + Dq_p * M_p + M_p * M_p + 3 * M_p)
    bytes_act = 4 * (tb * O_p * Dv_p + tb * L_p * Dq_p + tb * L_p * O_p + tb * M_p)
    bytes_mid = 4 * (tb * O_p * M_p + tb * L_p * M_p + tb * min(L_p, O_p) * M_p)
    vmem_limit = int(min(max(2 * bytes_w + 2 * bytes_act + 2 * bytes_mid, 16 << 20), 64 << 20))

    grid_spec = pltpu.PrefetchScalarGridSpec(
        num_scalar_prefetch=0,
        grid=(n_steps,),
        in_specs=[
            pl.BlockSpec((tb * O_p, Dv_p), lambda i: (i, 0)),    # v   (batch-tiled)
            pl.BlockSpec((tb * L_p, Dq_p), lambda i: (i, 0)),    # q   (batch-tiled)
            pl.BlockSpec((tb, L_p, O_p), lambda i: (i, 0, 0)),   # atten (batch-tiled)
            # Weights/biases: constant index_map -> fetched once, VMEM-resident across steps.
            # TODO(synk): at production M (e.g. 1024) add pipeline_mode=pl.Buffered(1) to the
            #             weight specs so the never-changing (M, M) block is not double-buffered.
            pl.BlockSpec((Dv_p, M_p), lambda i: (0, 0)),         # lin_v weight
            pl.BlockSpec((1, M_p), lambda i: (0, 0)),            # lin_v bias
            pl.BlockSpec((Dq_p, M_p), lambda i: (0, 0)),         # lin_q weight
            pl.BlockSpec((1, M_p), lambda i: (0, 0)),            # lin_q bias
            pl.BlockSpec((M_p, M_p), lambda i: (0, 0)),          # lin_atten weight
            pl.BlockSpec((1, M_p), lambda i: (0, 0)),            # lin_atten bias
        ],
        out_specs=pl.BlockSpec((tb, M_p), lambda i: (i, 0)),
    )

    out = pl.pallas_call(
        _apply_single_attention_kernel,
        out_shape=jax.ShapeDtypeStruct((B_p, M_p), jnp.float32),
        grid_spec=grid_spec,
        compiler_params=pltpu.CompilerParams(
            dimension_semantics=("parallel",),   # shard batch steps across TCs on v7x
            vmem_limit_bytes=vmem_limit,
        ),
    )(v_p, q_p, att_p, wv, bv, wq, bq, wa, ba)

    return out[:B, :M][:, None, :]    # (B, 1, M), matching the torch output shape


def init_params(key, v_feat, q_feat, mid_feat):
    """Deterministic synthetic weights.  weight_norm(Linear, dim=None): W = g * V / ||V||_F."""
    def weight_norm_linear(k, in_size, out_size):
        k1, k2, k3 = jax.random.split(k, 3)
        bound = 1.0 / np.sqrt(in_size)
        v_raw = jax.random.uniform(k1, (out_size, in_size), jnp.float32, -bound, bound)
        bias = jax.random.uniform(k2, (out_size,), jnp.float32, -bound, bound)
        g_scalar = 1.0 + 0.1 * jax.random.uniform(k3, (), jnp.float32)
        w_eff = g_scalar * v_raw / jnp.linalg.norm(v_raw)   # weight-norm reparameterization
        return w_eff.T, bias[None, :]                        # stored as (in, out), (1, out)

    kv, kq, ka = jax.random.split(key, 3)
    wv, bv = weight_norm_linear(kv, v_feat, mid_feat)
    wq, bq = weight_norm_linear(kq, q_feat, mid_feat)
    wa, ba = weight_norm_linear(ka, mid_feat, mid_feat)
    return {"wv": wv, "bv": bv, "wq": wq, "bq": bq, "wa": wa, "ba": ba}


def apply_single_attention_reference(v, q, atten, params):
    """Literal jnp transcription of the PyTorch forward (jnp.matmul == torch.matmul)."""
    v_lin = jax.nn.relu(v @ params["wv"] + params["bv"])            # (B, O, M)
    q_lin = jax.nn.relu(q @ params["wq"] + params["bq"])            # (B, L, M)
    v_ = jnp.swapaxes(v_lin, 1, 2)[:, :, None, :]                   # (B, M, 1, O)
    q_ = jnp.swapaxes(q_lin, 1, 2)[:, :, :, None]                   # (B, M, L, 1)
    at = jnp.squeeze(jnp.swapaxes(atten, 3, 1), axis=2)             # .transpose(3,1).squeeze(2)
    v_mm = jnp.matmul(jnp.squeeze(v_, axis=2), at)[:, :, None, :]   # (B, M, 1, L)
    h_ = jnp.matmul(v_mm, q_)                                       # (B, M, 1, 1)
    h_ = jnp.squeeze(jnp.squeeze(h_, axis=3), axis=2)               # (B, M)
    atten_h = h_[:, None, :] @ params["wa"] + params["ba"]          # (B, 1, M)
    return atten_h


if __name__ == "__main__":
    key = jax.random.PRNGKey(0)
    # Deliberately non-aligned small shapes: exercises B / O / L / Dv / Dq / M padding and a
    # multi-step (grid=(2,)) batch-tiled pipeline with resident weights.
    B, num_obj, que_len = 12, 7, 9
    v_features, q_features, mid_features = 20, 24, 48

    k1, k2, k3, k4 = jax.random.split(key, 4)
    v = jax.random.normal(k1, (B, num_obj, v_features), jnp.float32)
    q = jax.random.normal(k2, (B, que_len, q_features), jnp.float32)
    atten = jax.random.normal(k3, (B, que_len, 1, num_obj), jnp.float32)
    params = init_params(k4, v_features, q_features, mid_features)

    out = apply_single_attention_pallas(v, q, atten, params)
    out = jax.block_until_ready(out)

    ref = apply_single_attention_reference(v, q, atten, params)
    # bf16 MXU operands with f32 accumulation -> loosened tolerance (per review).
    np.testing.assert_allclose(np.asarray(out), np.asarray(ref), rtol=3e-2, atol=3e-2)
    print("KERNEL_OK")
</pallas_src>

<mosaic_0001>
module attributes {stable_mosaic.version = 11 : i64} {
  func.func @_apply_single_attention_kernel(%arg0: i32, %arg1: memref<64x128xf32, #tpu.memory_space<vmem>>, %arg2: memref<128x128xf32, #tpu.memory_space<vmem>>, %arg3: memref<8x16x8xf32, #tpu.memory_space<vmem>>, %arg4: memref<128x128xf32, #tpu.memory_space<vmem>>, %arg5: memref<1x128xf32, #tpu.memory_space<vmem>>, %arg6: memref<128x128xf32, #tpu.memory_space<vmem>>, %arg7: memref<1x128xf32, #tpu.memory_space<vmem>>, %arg8: memref<128x128xf32, #tpu.memory_space<vmem>>, %arg9: memref<1x128xf32, #tpu.memory_space<vmem>>, %arg10: memref<8x128xf32, #tpu.memory_space<vmem>>) attributes {dimension_semantics = [#tpu.dimension_semantics<parallel>], iteration_bounds = array<i64: 2>, scalar_prefetch = 0 : i64, scratch_operands = 0 : i64, tpu.core_type = #tpu.core_type<tc>, window_params = [{transform_indices = @transform_0, window_bounds = array<i64: 64, 128>}, {transform_indices = @transform_1, window_bounds = array<i64: 128, 128>}, {transform_indices = @transform_2, window_bounds = array<i64: 8, 16, 8>}, {pipeline_mode = #tpu.pipeline_mode<synchronous>, transform_indices = @transform_3, window_bounds = array<i64: 128, 128>}, {pipeline_mode = #tpu.pipeline_mode<synchronous>, transform_indices = @transform_4, window_bounds = array<i64: 1, 128>}, {pipeline_mode = #tpu.pipeline_mode<synchronous>, transform_indices = @transform_5, window_bounds = array<i64: 128, 128>}, {pipeline_mode = #tpu.pipeline_mode<synchronous>, transform_indices = @transform_6, window_bounds = array<i64: 1, 128>}, {pipeline_mode = #tpu.pipeline_mode<synchronous>, transform_indices = @transform_7, window_bounds = array<i64: 128, 128>}, {pipeline_mode = #tpu.pipeline_mode<synchronous>, transform_indices = @transform_8, window_bounds = array<i64: 1, 128>}, {transform_indices = @transform_9, window_bounds = array<i64: 8, 128>}]} {
    %c0 = arith.constant 0 : index
    %c0_0 = arith.constant 0 : index
    %0 = vector.load %arg1[%c0, %c0_0] : memref<64x128xf32, #tpu.memory_space<vmem>>, vector<64x128xf32>
    %1 = arith.truncf %0 : vector<64x128xf32> to vector<64x128xbf16>
    %c0_1 = arith.constant 0 : index
    %c0_2 = arith.constant 0 : index
    %2 = vector.load %arg4[%c0_1, %c0_2] : memref<128x128xf32, #tpu.memory_space<vmem>>, vector<128x128xf32>
    %3 = arith.truncf %2 : vector<128x128xf32> to vector<128x128xbf16>
    %cst = arith.constant dense<0.000000e+00> : vector<64x128xf32>
    %4 = tpu.matmul %1, %3, %cst {dimension_numbers = #tpu.dot_dimension_numbers<[1], [0], [0], [1], [0, 0, 1, 1], [], []>} : vector<64x128xbf16>, vector<128x128xbf16>, vector<64x128xf32> -> vector<64x128xf32>
    %c0_3 = arith.constant 0 : index
    %c0_4 = arith.constant 0 : index
    %5 = vector.load %arg5[%c0_3, %c0_4] : memref<1x128xf32, #tpu.memory_space<vmem>>, vector<1x128xf32>
    %6 = vector.broadcast %5 : vector<1x128xf32> to vector<64x128xf32>
    %7 = arith.addf %4, %6 : vector<64x128xf32>
    %cst_5 = arith.constant 0.000000e+00 : f32
    %8 = vector.broadcast %cst_5 : f32 to vector<64x128xf32>
    %9 = arith.maximumf %7, %8 : vector<64x128xf32>
    %c0_6 = arith.constant 0 : index
    %c0_7 = arith.constant 0 : index
    %10 = vector.load %arg2[%c0_6, %c0_7] : memref<128x128xf32, #tpu.memory_space<vmem>>, vector<128x128xf32>
    %11 = arith.truncf %10 : vector<128x128xf32> to vector<128x128xbf16>
    %c0_8 = arith.constant 0 : index
    %c0_9 = arith.constant 0 : index
    %12 = vector.load %arg6[%c0_8, %c0_9] : memref<128x128xf32, #tpu.memory_space<vmem>>, vector<128x128xf32>
    %13 = arith.truncf %12 : vector<128x128xf32> to vector<128x128xbf16>
    %cst_10 = arith.constant dense<0.000000e+00> : vector<128x128xf32>
    %14 = tpu.matmul %11, %13, %cst_10 {dimension_numbers = #tpu.dot_dimension_numbers<[1], [0], [0], [1], [0, 0, 1, 1], [], []>} : vector<128x128xbf16>, vector<128x128xbf16>, vector<128x128xf32> -> vector<128x128xf32>
    %c0_11 = arith.constant 0 : index
    %c0_12 = arith.constant 0 : index
    %15 = vector.load %arg7[%c0_11, %c0_12] : memref<1x128xf32, #tpu.memory_space<vmem>>, vector<1x128xf32>
    %16 = vector.broadcast %15 : vector<1x128xf32> to vector<128x128xf32>
    %17 = arith.addf %14, %16 : vector<128x128xf32>
    %cst_13 = arith.constant 0.000000e+00 : f32
    %18 = vector.broadcast %cst_13 : f32 to vector<128x128xf32>
    %19 = arith.maximumf %17, %18 : vector<128x128xf32>
    %20 = vector.shape_cast %9 : vector<64x128xf32> to vector<8x8x128xf32>
    %21 = vector.shape_cast %19 : vector<128x128xf32> to vector<8x16x128xf32>
    %c0_14 = arith.constant 0 : index
    %c0_15 = arith.constant 0 : index
    %c0_16 = arith.constant 0 : index
    %22 = vector.load %arg3[%c0_14, %c0_15, %c0_16] : memref<8x16x8xf32, #tpu.memory_space<vmem>>, vector<8x16x8xf32>
    %23 = tpu.transpose %22, [0, 2, 1] : vector<8x16x8xf32> -> vector<8x8x16xf32>
    %24 = arith.truncf %23 : vector<8x8x16xf32> to vector<8x8x16xbf16>
    %25 = arith.truncf %21 : vector<8x16x128xf32> to vector<8x16x128xbf16>
    "tpu.trace_start"() <{level = 10 : i32, message = "bol,blm->bom"}> : () -> ()
    %cst_17 = arith.constant dense<0.000000e+00> : vector<8x8x128xf32>
    %26 = tpu.matmul %24, %25, %cst_17 {dimension_numbers = #tpu.dot_dimension_numbers<[2], [1], [1], [2], [0, 0, 0, 1, 1, 2], [0], [0]>} : vector<8x8x16xbf16>, vector<8x16x128xbf16>, vector<8x8x128xf32> -> vector<8x8x128xf32>
    "tpu.trace_stop"() : () -> ()
    %27 = arith.mulf %26, %20 : vector<8x8x128xf32>
    %cst_18 = arith.constant dense<0.000000e+00> : vector<8x128xf32>
    %28 = vector.multi_reduction <add>, %27, %cst_18 [1] : vector<8x8x128xf32> to vector<8x128xf32>
    %29 = arith.truncf %28 : vector<8x128xf32> to vector<8x128xbf16>
    %c0_19 = arith.constant 0 : index
    %c0_20 = arith.constant 0 : index
    %30 = vector.load %arg8[%c0_19, %c0_20] : memref<128x128xf32, #tpu.memory_space<vmem>>, vector<128x128xf32>
    %31 = arith.truncf %30 : vector<128x128xf32> to vector<128x128xbf16>
    %cst_21 = arith.constant dense<0.000000e+00> : vector<8x128xf32>
    %32 = tpu.matmul %29, %31, %cst_21 {dimension_numbers = #tpu.dot_dimension_numbers<[1], [0], [0], [1], [0, 0, 1, 1], [], []>} : vector<8x128xbf16>, vector<128x128xbf16>, vector<8x128xf32> -> vector<8x128xf32>
    %c0_22 = arith.constant 0 : index
    %c0_23 = arith.constant 0 : index
    %33 = vector.load %arg9[%c0_22, %c0_23] : memref<1x128xf32, #tpu.memory_space<vmem>>, vector<1x128xf32>
    %34 = vector.broadcast %33 : vector<1x128xf32> to vector<8x128xf32>
    %35 = arith.addf %32, %34 : vector<8x128xf32>
    %c0_24 = arith.constant 0 : index
    %c0_25 = arith.constant 0 : index
    %36 = vector.load %arg10[%c0_24, %c0_25] : memref<8x128xf32, #tpu.memory_space<vmem>>, vector<8x128xf32>
    tpu.vector_store %arg10[%c0_24, %c0_25], %35 {strides = array<i32>} : memref<8x128xf32, #tpu.memory_space<vmem>>, vector<8x128xf32>,
    return
  }
  func.func @transform_0(%arg0: i32) -> (i32, i32) {
    %c0_i32 = arith.constant 0 : i32
    %c0_i32_0 = arith.constant 0 : i32
    return %arg0, %c0_i32 : i32, i32
  }
  func.func @transform_1(%arg0: i32) -> (i32, i32) {
    %c0_i32 = arith.constant 0 : i32
    %c0_i32_0 = arith.constant 0 : i32
    return %arg0, %c0_i32 : i32, i32
  }
  func.func @transform_2(%arg0: i32) -> (i32, i32, i32) {
    %c0_i32 = arith.constant 0 : i32
    %c0_i32_0 = arith.constant 0 : i32
    %c0_i32_1 = arith.constant 0 : i32
    return %arg0, %c0_i32, %c0_i32_0 : i32, i32, i32
  }
  func.func @transform_3(%arg0: i32) -> (i32, i32) {
    %c0_i32 = arith.constant 0 : i32
    %c0_i32_0 = arith.constant 0 : i32
    %c0_i32_1 = arith.constant 0 : i32
    return %c0_i32, %c0_i32_0 : i32, i32
  }
  func.func @transform_4(%arg0: i32) -> (i32, i32) {
    %c0_i32 = arith.constant 0 : i32
    %c0_i32_0 = arith.constant 0 : i32
    %c0_i32_1 = arith.constant 0 : i32
    return %c0_i32, %c0_i32_0 : i32, i32
  }
  func.func @transform_5(%arg0: i32) -> (i32, i32) {
    %c0_i32 = arith.constant 0 : i32
    %c0_i32_0 = arith.constant 0 : i32
    %c0_i32_1 = arith.constant 0 : i32
    return %c0_i32, %c0_i32_0 : i32, i32
  }
  func.func @transform_6(%arg0: i32) -> (i32, i32) {
    %c0_i32 = arith.constant 0 : i32
    %c0_i32_0 = arith.constant 0 : i32
    %c0_i32_1 = arith.constant 0 : i32
    return %c0_i32, %c0_i32_0 : i32, i32
  }
  func.func @transform_7(%arg0: i32) -> (i32, i32) {
    %c0_i32 = arith.constant 0 : i32
    %c0_i32_0 = arith.constant 0 : i32
    %c0_i32_1 = arith.constant 0 : i32
    return %c0_i32, %c0_i32_0 : i32, i32
  }
  func.func @transform_8(%arg0: i32) -> (i32, i32) {
    %c0_i32 = arith.constant 0 : i32
    %c0_i32_0 = arith.constant 0 : i32
    %c0_i32_1 = arith.constant 0 : i32
    return %c0_i32, %c0_i32_0 : i32, i32
  }
  func.func @transform_9(%arg0: i32) -> (i32, i32) {
    %c0_i32 = arith.constant 0 : i32
    %c0_i32_0 = arith.constant 0 : i32
    return %arg0, %c0_i32 : i32, i32
  }
}

</mosaic_0001>

<llo_original>
// kernel: tpu_custom_call.1
$region0: #{tpu_custom_call.1}
  #allocation0 [shape = 'u32[]', space=smem, size = 0x4, offset = 0x4, fixed_abs, tag = 'smem constant byte address 0x4 - core index']
  #allocation1 [shape = 'u32[144,128]{1,0:T(1,128)}', space=vmem, size = 0x12000, scoped, tag = 'internal scratch']
  %s0 = inlined_call_operand.vmem [shape: f32[128,128], index: 0, kind: input, shape index: {}]
  %s1 = inlined_call_operand.vmem [shape: f32[256,128], index: 1, kind: input, shape index: {}]
  %s2 = inlined_call_operand.vmem [shape: f32[16,16,8], index: 2, kind: input, shape index: {}]
  %s3 = inlined_call_operand.hbm [shape: f32[128,128], index: 3, kind: input, shape index: {}]
  %s4 = inlined_call_operand.vmem [shape: f32[1,128], index: 4, kind: input, shape index: {}]
  %s5 = inlined_call_operand.hbm [shape: f32[128,128], index: 5, kind: input, shape index: {}]
  %s6 = inlined_call_operand.vmem [shape: f32[1,128], index: 6, kind: input, shape index: {}]
  %s7 = inlined_call_operand.hbm [shape: f32[128,128], index: 7, kind: input, shape index: {}]
  %s8 = inlined_call_operand.vmem [shape: f32[1,128], index: 8, kind: input, shape index: {}]
  %s9 = inlined_call_operand.hbm [shape: f32[16,128], index: 9, kind: output, shape index: {}]
  %s10 = sld [smem:[#allocation0]]
  $region81: #{tpu_custom_call.1} parent=0
    _
  %s12 = ssub.s32 1, %s10
  %s13 = scalar_select 0, %s12, %s10
  $region1: #{tpu_custom_call.1} parent=0
    #allocation2 [shape = 'u8[65536]{0}', space=vmem, size = 0x10000, scoped, tag = 'input window, operand 3, single buffered']
    #allocation3 [shape = 's32[2]{0}', space=sflag, size = 0x8, scoped, tag = 'scoped memory for tpu_custom_call.1']
    #allocation4 [shape = 's32[2]{0}', space=sflag, size = 0x8, scoped, tag = 'scoped memory for tpu_custom_call.1']
    #allocation5 [shape = 'u8[65536]{0}', space=vmem, size = 0x10000, scoped, tag = 'input window, operand 5, single buffered']
    #allocation6 [shape = 's32[1]{0}', space=sflag, size = 0x4, scoped, tag = 'scoped memory for tpu_custom_call.1']
    #allocation7 [shape = 'u8[65536]{0}', space=vmem, size = 0x10000, scoped, tag = 'input window, operand 7, single buffered']
    #allocation8 [shape = 'u8[8192]{0}', space=vmem, size = 0x2000, scoped, tag = 'output window, operand 0']
    %14 = vsyncpa [#allocation3], 0
    %15 = vsyncpa [#allocation6], 0
    %16 = vsyncpa [#allocation4], 0
    %s17 = scalar_lea.sflag [#allocation4], 1
    %18 = vsyncpa %s17, 0
    loop: start=0, step=1, limit=4
    $region2: #{tpu_custom_call.1} parent=1 // loop_pre_header
      _
    $region3: #{tpu_custom_call.1} parent=1 // loop_header
      %s20 = sphi 0, %s24
      %p21 = scmp.ge.s32.totalorder %s20, 4
      %s30 = sphi 0, %s32
      %s33 = sphi 0, %s30
      %s34 = sphi 0, %s33
      %s50 = sphi 0, %s34
      %s56 = sphi 0, %s58
      %s59 = sphi 0, %s56
      %s60 = sphi 0, %s59
      %s76 = sphi 0, %s60
      %s82 = sphi 0, %s84
      %s85 = sphi 0, %s82
      %s86 = sphi 0, %s85
      %s102 = sphi 0, %s86
      %s106 = sphi 0, %s106
      %s108 = sphi 0, %s106
      %s109 = sphi 0, %s108
      %s123 = sphi 0, %s109
      %s127 = sphi 0, %s127
      %s129 = sphi 0, %s127
      %s130 = sphi 0, %s129
      %s144 = sphi 0, %s130
      %s148 = sphi 0, %s148
      %s150 = sphi 0, %s148
      %s151 = sphi 0, %s150
      %s165 = sphi 0, %s151
      %s169 = sphi 0, %s169
      %s171 = sphi 0, %s169
      %s172 = sphi 0, %s171
      %s186 = sphi 0, %s172
      %s190 = sphi 0, %s190
      %s192 = sphi 0, %s190
      %s193 = sphi 0, %s192
      %s207 = sphi 0, %s193
      %s211 = sphi 0, %s211
      %s213 = sphi 0, %s211
      %s214 = sphi 0, %s213
      %s228 = sphi 0, %s214
      %s234 = sphi 0, %s236
      %s237 = sphi 0, %s234
      %s238 = sphi 0, %s237
      %s254 = sphi 0, %s238
    $region4: #{tpu_custom_call.1} parent=1 // loop_header_branch
      %23 = sbr.rel (%p21) target = $region8
    $region5: #{tpu_custom_call.1} parent=1 // loop_body
      %s25 = ssub.s32 %s20, 1
      %s26 = ssub.s32 %s20, 2
      %s27 = sadd.s32 %s20, 1
      %s28 = ssub.s32 %s20, %s27
      %p29 = scmp.eq.s32.totalorder %s28, 0
      %s31 = sadd.s32 %s30, 1
      %s32 = scalar_select %p29, %s30, %s31
      %p35 = pneg %p29
      %p36 = scmp.eq.s32.totalorder %s20, 1
      %p37 = por %p35, %p36
      %p38 = scmp.ne.s32.totalorder %s30, %s33
      %p39 = scmp.eq.s32.totalorder %s20, 0
      %p40 = por %p38, %p39
      %p41 = scmp.ne.s32.totalorder %s30, %s33
      %p42 = scmp.eq.s32.totalorder %s25, 1
      %p43 = por %p41, %p42
      %p44 = scmp.ne.s32.totalorder %s33, %s34
      %p45 = scmp.eq.s32.totalorder %s25, 0
      %p46 = por %p44, %p45
      %p47 = scmp.ne.s32.totalorder %s33, %s34
      %p48 = scmp.eq.s32.totalorder %s26, 1
      %p49 = por %p47, %p48
      %p51 = scmp.ne.s32.totalorder %s34, %s50
      %p52 = scmp.eq.s32.totalorder %s26, 0
      %p53 = por %p51, %p52
      %s54 = ssub.s32 %s20, %s27
      %p55 = scmp.eq.s32.totalorder %s54, 0
      %s57 = sadd.s32 %s56, 1
      %s58 = scalar_select %p55, %s56, %s57
      %p61 = pneg %p55
      %p62 = scmp.eq.s32.totalorder %s20, 1
      %p63 = por %p61, %p62
      %p64 = scmp.ne.s32.totalorder %s56, %s59
      %p65 = scmp.eq.s32.totalorder %s20, 0
      %p66 = por %p64, %p65
      %p67 = scmp.ne.s32.totalorder %s56, %s59
      %p68 = scmp.eq.s32.totalorder %s25, 1
      %p69 = por %p67, %p68
      %p70 = scmp.ne.s32.totalorder %s59, %s60
      %p71 = scmp.eq.s32.totalorder %s25, 0
      %p72 = por %p70, %p71
      %p73 = scmp.ne.s32.totalorder %s59, %s60
      %p74 = scmp.eq.s32.totalorder %s26, 1
      %p75 = por %p73, %p74
      %p77 = scmp.ne.s32.totalorder %s60, %s76
      %p78 = scmp.eq.s32.totalorder %s26, 0
      %p79 = por %p77, %p78
      %s80 = ssub.s32 %s20, %s27
      %p81 = scmp.eq.s32.totalorder %s80, 0
      %s83 = sadd.s32 %s82, 1
      %s84 = scalar_select %p81, %s82, %s83
      %p87 = pneg %p81
      %p88 = scmp.eq.s32.totalorder %s20, 1
      %p89 = por %p87, %p88
      %p90 = scmp.ne.s32.totalorder %s82, %s85
      %p91 = scmp.eq.s32.totalorder %s20, 0
      %p92 = por %p90, %p91
      %p93 = scmp.ne.s32.totalorder %s82, %s85
      %p94 = scmp.eq.s32.totalorder %s25, 1
      %p95 = por %p93, %p94
      %p96 = scmp.ne.s32.totalorder %s85, %s86
      %p97 = scmp.eq.s32.totalorder %s25, 0
      %p98 = por %p96, %p97
      %p99 = scmp.ne.s32.totalorder %s85, %s86
      %p100 = scmp.eq.s32.totalorder %s26, 1
      %p101 = por %p99, %p100
      %p103 = scmp.ne.s32.totalorder %s86, %s102
      %p104 = scmp.eq.s32.totalorder %s26, 0
      %p105 = por %p103, %p104
      %s107 = sadd.s32 %s106, 1
      %p110 = scmp.eq.s32.totalorder %s20, 1
      %p111 = scmp.ne.s32.totalorder %s106, %s108
      %p112 = scmp.eq.s32.totalorder %s20, 0
      %p113 = por %p111, %p112
      %p114 = scmp.ne.s32.totalorder %s106, %s108
      %p115 = scmp.eq.s32.totalorder %s25, 1
      %p116 = por %p114, %p115
      %p117 = scmp.ne.s32.totalorder %s108, %s109
      %p118 = scmp.eq.s32.totalorder %s25, 0
      %p119 = por %p117, %p118
      %p120 = scmp.ne.s32.totalorder %s108, %s109
      %p121 = scmp.eq.s32.totalorder %s26, 1
      %p122 = por %p120, %p121
      %p124 = scmp.ne.s32.totalorder %s109, %s123
      %p125 = scmp.eq.s32.totalorder %s26, 0
      %p126 = por %p124, %p125
      %s128 = sadd.s32 %s127, 1
      %p131 = scmp.eq.s32.totalorder %s20, 1
      %p132 = scmp.ne.s32.totalorder %s127, %s129
      %p133 = scmp.eq.s32.totalorder %s20, 0
      %p134 = por %p132, %p133
      %p135 = scmp.ne.s32.totalorder %s127, %s129
      %p136 = scmp.eq.s32.totalorder %s25, 1
      %p137 = por %p135, %p136
      %p138 = scmp.ne.s32.totalorder %s129, %s130
      %p139 = scmp.eq.s32.totalorder %s25, 0
      %p140 = por %p138, %p139
      %p141 = scmp.ne.s32.totalorder %s129, %s130
      %p142 = scmp.eq.s32.totalorder %s26, 1
      %p143 = por %p141, %p142
      %p145 = scmp.ne.s32.totalorder %s130, %s144
      %p146 = scmp.eq.s32.totalorder %s26, 0
      %p147 = por %p145, %p146
      %s149 = sadd.s32 %s148, 1
      %p152 = scmp.eq.s32.totalorder %s20, 1
      %p153 = scmp.ne.s32.totalorder %s148, %s150
      %p154 = scmp.eq.s32.totalorder %s20, 0
      %p155 = por %p153, %p154
      %p156 = scmp.ne.s32.totalorder %s148, %s150
      %p157 = scmp.eq.s32.totalorder %s25, 1
      %p158 = por %p156, %p157
      %p159 = scmp.ne.s32.totalorder %s150, %s151
      %p160 = scmp.eq.s32.totalorder %s25, 0
      %p161 = por %p159, %p160
      %p162 = scmp.ne.s32.totalorder %s150, %s151
      %p163 = scmp.eq.s32.totalorder %s26, 1
      %p164 = por %p162, %p163
      %p166 = scmp.ne.s32.totalorder %s151, %s165
      %p167 = scmp.eq.s32.totalorder %s26, 0
      %p168 = por %p166, %p167
      %s170 = sadd.s32 %s169, 1
      %p173 = scmp.eq.s32.totalorder %s20, 1
      %p174 = scmp.ne.s32.totalorder %s169, %s171
      %p175 = scmp.eq.s32.totalorder %s20, 0
      %p176 = por %p174, %p175
      %p177 = scmp.ne.s32.totalorder %s169, %s171
      %p178 = scmp.eq.s32.totalorder %s25, 1
      %p179 = por %p177, %p178
      %p180 = scmp.ne.s32.totalorder %s171, %s172
      %p181 = scmp.eq.s32.totalorder %s25, 0
      %p182 = por %p180, %p181
      %p183 = scmp.ne.s32.totalorder %s171, %s172
      %p184 = scmp.eq.s32.totalorder %s26, 1
      %p185 = por %p183, %p184
      %p187 = scmp.ne.s32.totalorder %s172, %s186
      %p188 = scmp.eq.s32.totalorder %s26, 0
      %p189 = por %p187, %p188
      %s191 = sadd.s32 %s190, 1
      %p194 = scmp.eq.s32.totalorder %s20, 1
      %p195 = scmp.ne.s32.totalorder %s190, %s192
      %p196 = scmp.eq.s32.totalorder %s20, 0
      %p197 = por %p195, %p196
      %p198 = scmp.ne.s32.totalorder %s190, %s192
      %p199 = scmp.eq.s32.totalorder %s25, 1
      %p200 = por %p198, %p199
      %p201 = scmp.ne.s32.totalorder %s192, %s193
      %p202 = scmp.eq.s32.totalorder %s25, 0
      %p203 = por %p201, %p202
      %p204 = scmp.ne.s32.totalorder %s192, %s193
      %p205 = scmp.eq.s32.totalorder %s26, 1
      %p206 = por %p204, %p205
      %p208 = scmp.ne.s32.totalorder %s193, %s207
      %p209 = scmp.eq.s32.totalorder %s26, 0
      %p210 = por %p208, %p209
      %s212 = sadd.s32 %s211, 1
      %p215 = scmp.eq.s32.totalorder %s20, 1
      %p216 = scmp.ne.s32.totalorder %s211, %s213
      %p217 = scmp.eq.s32.totalorder %s20, 0
      %p218 = por %p216, %p217
      %p219 = scmp.ne.s32.totalorder %s211, %s213
      %p220 = scmp.eq.s32.totalorder %s25, 1
      %p221 = por %p219, %p220
      %p222 = scmp.ne.s32.totalorder %s213, %s214
      %p223 = scmp.eq.s32.totalorder %s25, 0
      %p224 = por %p222, %p223
      %p225 = scmp.ne.s32.totalorder %s213, %s214
      %p226 = scmp.eq.s32.totalorder %s26, 1
      %p227 = por %p225, %p226
      %p229 = scmp.ne.s32.totalorder %s214, %s228
      %p230 = scmp.eq.s32.totalorder %s26, 0
      %p231 = por %p229, %p230
      %s232 = ssub.s32 %s20, %s27
      %p233 = scmp.eq.s32.totalorder %s232, 0
      %s235 = sadd.s32 %s234, 1
      %s236 = scalar_select %p233, %s234, %s235
      %p239 = pneg %p233
      %p240 = scmp.eq.s32.totalorder %s20, 1
      %p241 = por %p239, %p240
      %p242 = scmp.ne.s32.totalorder %s234, %s237
      %p243 = scmp.eq.s32.totalorder %s20, 0
      %p244 = por %p242, %p243
      %p245 = scmp.ne.s32.totalorder %s234, %s237
      %p246 = scmp.eq.s32.totalorder %s25, 1
      %p247 = por %p245, %p246
      %p248 = scmp.ne.s32.totalorder %s237, %s238
      %p249 = scmp.eq.s32.totalorder %s25, 0
      %p250 = por %p248, %p249
      %p251 = scmp.ne.s32.totalorder %s237, %s238
      %p252 = scmp.eq.s32.totalorder %s26, 1
      %p253 = por %p251, %p252
      %p255 = scmp.ne.s32.totalorder %s238, %s254
      %p256 = scmp.eq.s32.totalorder %s26, 0
      %p257 = por %p255, %p256
      %p258 = scmp.le.s32.totalorder 1, %s20
      %p259 = scmp.lt.s32.totalorder %s20, 3
      %p260 = pnand %p258, %p259
      %p261 = pneg %p260
      // Predicated region
      $region9: #{tpu_custom_call.1} parent=5 // pred_check
        _
      $region10: #{tpu_custom_call.1} parent=5 // pred_check_branch
        %263 = sbr.rel (%p260) target = $region12
      $region11: #{tpu_custom_call.1} parent=5 // pred_region
        %s264 = ssub.s32 %s20, 1
        // Predicated region
        $region13: #{tpu_custom_call.1} parent=11 // pred_check
          %p265 = pneg %p119
        $region14: #{tpu_custom_call.1} parent=11 // pred_check_branch
          %267 = sbr.rel (%p265) target = $region16
        $region15: #{tpu_custom_call.1} parent=11 // pred_region
          %s269 = ssub.s32 2048, 2048
          %270 = vsyncadd [#allocation3], %s269
          %s271 = sshll.u32 [#allocation2], 4
          %s272 = int_to_ptr.vmem [resolvable:$true] %s271
          %277 = dma.hbm_to_vmem [thread:$0]  %s3, 2048, %s272, [#allocation3], 128, 128, 8
        $region16: #{tpu_custom_call.1} parent=11 // pred_fallthru
          _
        // Predicated region
        $region17: #{tpu_custom_call.1} parent=11 // pred_check
          %p278 = pneg %p140
        $region18: #{tpu_custom_call.1} parent=11 // pred_check_branch
          %280 = sbr.rel (%p278) target = $region20
        $region19: #{tpu_custom_call.1} parent=11 // pred_region
          _
        $region20: #{tpu_custom_call.1} parent=11 // pred_fallthru
          _
        // Predicated region
        $region21: #{tpu_custom_call.1} parent=11 // pred_check
          %p281 = pneg %p161
        $region22: #{tpu_custom_call.1} parent=11 // pred_check_branch
          %283 = sbr.rel (%p281) target = $region24
        $region23: #{tpu_custom_call.1} parent=11 // pred_region
          %s285 = ssub.s32 2048, 2048
          %286 = vsyncadd [#allocation6], %s285
          %s287 = sshll.u32 [#allocation5], 4
          %s288 = int_to_ptr.vmem [resolvable:$true] %s287
          %293 = dma.hbm_to_vmem [thread:$0]  %s5, 2048, %s288, [#allocation6], 128, 128, 8
        $region24: #{tpu_custom_call.1} parent=11 // pred_fallthru
          _
        // Predicated region
        $region25: #{tpu_custom_call.1} parent=11 // pred_check
          %p294 = pneg %p182
        $region26: #{tpu_custom_call.1} parent=11 // pred_check_branch
          %296 = sbr.rel (%p294) target = $region28
        $region27: #{tpu_custom_call.1} parent=11 // pred_region
          _
        $region28: #{tpu_custom_call.1} parent=11 // pred_fallthru
          _
        // Predicated region
        $region29: #{tpu_custom_call.1} parent=11 // pred_check
          %p297 = pneg %p203
        $region30: #{tpu_custom_call.1} parent=11 // pred_check_branch
          %299 = sbr.rel (%p297) target = $region32
        $region31: #{tpu_custom_call.1} parent=11 // pred_region
          %s301 = ssub.s32 2048, 2048
          %302 = vsyncadd [#allocation6], %s301
          %s303 = sshll.u32 [#allocation7], 4
          %s304 = int_to_ptr.vmem [resolvable:$true] %s303
          %309 = dma.hbm_to_vmem [thread:$0]  %s7, 2048, %s304, [#allocation6], 128, 128, 8
        $region32: #{tpu_custom_call.1} parent=11 // pred_fallthru
          _
        // Predicated region
        $region33: #{tpu_custom_call.1} parent=11 // pred_check
          %p310 = pneg %p224
        $region34: #{tpu_custom_call.1} parent=11 // pred_check_branch
          %312 = sbr.rel (%p310) target = $region36
        $region35: #{tpu_custom_call.1} parent=11 // pred_region
          _
        $region36: #{tpu_custom_call.1} parent=11 // pred_fallthru
          _
      $region12: #{tpu_custom_call.1} parent=5 // pred_fallthru
        _
      %p313 = scmp.lt.s32.totalorder %s20, 2
      // Predicated region
      $region37: #{tpu_custom_call.1} parent=5 // pred_check
        %p314 = pneg %p313
      $region38: #{tpu_custom_call.1} parent=5 // pred_check_branch
        %316 = sbr.rel (%p314) target = $region40
      $region39: #{tpu_custom_call.1} parent=5 // pred_region
        // Predicated region
        $region41: #{tpu_custom_call.1} parent=39 // pred_check
          %p317 = pneg %p40
        $region42: #{tpu_custom_call.1} parent=39 // pred_check_branch
          %319 = sbr.rel (%p317) target = $region44
        $region43: #{tpu_custom_call.1} parent=39 // pred_region
          %s320 = smul.u32 8, %s20
          %p321 = scmp.lt.s32.totalorder %s320, 15
          %s322 = scalar_select %p321, %s320, 15
          %s323 = smul.addr %s322, 8
          %s324 = scalar_lea.vmem %s0, %s323
          %s325 = smul.u32 8, %s20
        $region44: #{tpu_custom_call.1} parent=39 // pred_fallthru
          _
        // Predicated region
        $region45: #{tpu_custom_call.1} parent=39 // pred_check
          %p326 = pneg %p66
        $region46: #{tpu_custom_call.1} parent=39 // pred_check_branch
          %328 = sbr.rel (%p326) target = $region48
        $region47: #{tpu_custom_call.1} parent=39 // pred_region
          %s329 = smul.u32 16, %s20
          %p330 = scmp.lt.s32.totalorder %s329, 31
          %s331 = scalar_select %p330, %s329, 31
          %s332 = smul.addr %s331, 8
          %s333 = scalar_lea.vmem %s1, %s332
          %s334 = smul.u32 16, %s20
        $region48: #{tpu_custom_call.1} parent=39 // pred_fallthru
          _
        // Predicated region
        $region49: #{tpu_custom_call.1} parent=39 // pred_check
          %p335 = pneg %p92
        $region50: #{tpu_custom_call.1} parent=39 // pred_check_branch
          %337 = sbr.rel (%p335) target = $region52
        $region51: #{tpu_custom_call.1} parent=39 // pred_region
          %s338 = smul.u32 8, %s20
          %p339 = scmp.lt.s32.totalorder %s338, 15
          %s340 = scalar_select %p339, %s338, 15
          %s341 = smul.addr %s340, 2
          %s342 = smul.addr %s341, 8
          %s343 = scalar_lea.vmem %s2, %s342
          %s344 = smul.u32 8, %s20
        $region52: #{tpu_custom_call.1} parent=39 // pred_fallthru
          _
      $region40: #{tpu_custom_call.1} parent=5 // pred_fallthru
        _
      %p345 = scmp.le.s32.totalorder 1, %s20
      %p346 = scmp.lt.s32.totalorder %s20, 3
      %p347 = pnand %p345, %p346
      %p348 = pneg %p347
      // Predicated region
      $region53: #{tpu_custom_call.1} parent=5 // pred_check
        _
      $region54: #{tpu_custom_call.1} parent=5 // pred_check_branch
        %350 = sbr.rel (%p347) target = $region56
      $region55: #{tpu_custom_call.1} parent=5 // pred_region
        %s351 = ssub.s32 %s20, 1
        // Predicated region
        $region57: #{tpu_custom_call.1} parent=55 // pred_check
          %p352 = pneg %p119
        $region58: #{tpu_custom_call.1} parent=55 // pred_check_branch
          %354 = sbr.rel (%p352) target = $region60
        $region59: #{tpu_custom_call.1} parent=55 // pred_region
          %355 = dma.done [#allocation3], 2048
        $region60: #{tpu_custom_call.1} parent=55 // pred_fallthru
          _
        // Predicated region
        $region61: #{tpu_custom_call.1} parent=55 // pred_check
          %p356 = pneg %p161
        $region62: #{tpu_custom_call.1} parent=55 // pred_check_branch
          %358 = sbr.rel (%p356) target = $region64
        $region63: #{tpu_custom_call.1} parent=55 // pred_region
          %359 = dma.done [#allocation6], 2048
        $region64: #{tpu_custom_call.1} parent=55 // pred_fallthru
          _
        // Predicated region
        $region65: #{tpu_custom_call.1} parent=55 // pred_check
          %p360 = pneg %p203
        $region66: #{tpu_custom_call.1} parent=55 // pred_check_branch
          %362 = sbr.rel (%p360) target = $region68
        $region67: #{tpu_custom_call.1} parent=55 // pred_region
          %363 = dma.done [#allocation6], 2048
        $region68: #{tpu_custom_call.1} parent=55 // pred_fallthru
          _
        %s364 = smul.u32 8, %s25
        %p365 = scmp.lt.s32.totalorder %s364, 15
        %s366 = scalar_select %p365, %s364, 15
        %s367 = smul.addr %s366, 8
        %s368 = scalar_lea.vmem %s0, %s367
        %p369 = pneg %p46
        %p370 = pneg %p43
        %s371 = smul.u32 16, %s25
        %p372 = scmp.lt.s32.totalorder %s371, 31
        %s373 = scalar_select %p372, %s371, 31
        %s374 = smul.addr %s373, 8
        %s375 = scalar_lea.vmem %s1, %s374
        %p376 = pneg %p72
        %p377 = pneg %p69
        %s378 = smul.u32 8, %s25
        %p379 = scmp.lt.s32.totalorder %s378, 15
        %s380 = scalar_select %p379, %s378, 15
        %s381 = smul.addr %s380, 2
        %s382 = smul.addr %s381, 8
        %s383 = scalar_lea.vmem %s2, %s382
        %p384 = pneg %p98
        %p385 = pneg %p95
        %p386 = pneg %p119
        %p387 = pneg %p116
        %p388 = pneg %p140
        %p389 = pneg %p137
        %p390 = pneg %p161
        %p391 = pneg %p158
        %p392 = pneg %p182
        %p393 = pneg %p179
        %p394 = pneg %p203
        %p395 = pneg %p200
        %p396 = pneg %p224
        %p397 = pneg %p221
        %p398 = pneg %p250
        %p399 = pneg %p247
        %s400 = sand.u32 %s237, 1
        %s401 = scalar_lea.sflag [#allocation4], %s400
        %s402 = sand.u32 %s237, 1
        %s403 = smul.addr %s402, 8
        %s404 = scalar_lea.vmem [#allocation8], %s403
        %s405 = smul.u32 8, %s25
        %p406 = scmp.lt.s32.totalorder %s405, 15
        %s407 = scalar_select %p406, %s405, 15
        %s408 = smul.addr %s407, 8
        %s409 = scalar_lea.vmem %s0, %s408
        %s410 = smul.u32 8, %s25
        %s411 = smul.u32 16, %s25
        %p412 = scmp.lt.s32.totalorder %s411, 31
        %s413 = scalar_select %p412, %s411, 31
        %s414 = smul.addr %s413, 8
        %s415 = scalar_lea.vmem %s1, %s414
        %s416 = smul.u32 16, %s25
        %s417 = smul.u32 8, %s25
        %p418 = scmp.lt.s32.totalorder %s417, 15
        %s419 = scalar_select %p418, %s417, 15
        %s420 = smul.addr %s419, 2
        %s421 = smul.addr %s420, 8
        %s422 = scalar_lea.vmem %s2, %s421
        %s423 = smul.u32 8, %s25
        %v425 = vld [vmem:[%s409] sm:$0xff]
        %v426 = vld [vmem:[%s409 + $0x8] sm:$0xff]
        %v427 = vld [vmem:[%s409 + $0x10] sm:$0xff]
        %v428 = vld [vmem:[%s409 + $0x18] sm:$0xff]
        %v429 = vld [vmem:[%s409 + $0x20] sm:$0xff]
        %v430 = vld [vmem:[%s409 + $0x28] sm:$0xff]
        %v431 = vld [vmem:[%s409 + $0x30] sm:$0xff]
        %v432 = vld [vmem:[%s409 + $0x38] sm:$0xff]
        %v433 = vpack.c.bf16 %v426, %v425
        %v434 = vpack.c.bf16 %v428, %v427
        %v435 = vpack.c.bf16 %v430, %v429
        %v436 = vpack.c.bf16 %v432, %v431
        %v437 = vld [vmem:[#allocation2] sm:$0xff]
        %v438 = vld [vmem:[#allocation2 + $0x8] sm:$0xff]
        %v439 = vld [vmem:[#allocation2 + $0x10] sm:$0xff]
        %v440 = vld [vmem:[#allocation2 + $0x18] sm:$0xff]
        %v441 = vld [vmem:[#allocation2 + $0x20] sm:$0xff]
        %v442 = vld [vmem:[#allocation2 + $0x28] sm:$0xff]
        %v443 = vld [vmem:[#allocation2 + $0x30] sm:$0xff]
        %v444 = vld [vmem:[#allocation2 + $0x38] sm:$0xff]
        %v445 = vld [vmem:[#allocation2 + $0x40] sm:$0xff]
        %v446 = vld [vmem:[#allocation2 + $0x48] sm:$0xff]
        %v447 = vld [vmem:[#allocation2 + $0x50] sm:$0xff]
        %v448 = vld [vmem:[#allocation2 + $0x58] sm:$0xff]
        %v449 = vld [vmem:[#allocation2 + $0x60] sm:$0xff]
        %v450 = vld [vmem:[#allocation2 + $0x68] sm:$0xff]
        %v451 = vld [vmem:[#allocation2 + $0x70] sm:$0xff]
        %v452 = vld [vmem:[#allocation2 + $0x78] sm:$0xff]
        %v453 = vpack.c.bf16 %v438, %v437
        %v454 = vpack.c.bf16 %v440, %v439
        %v455 = vpack.c.bf16 %v442, %v441
        %v456 = vpack.c.bf16 %v444, %v443
        %v457 = vpack.c.bf16 %v446, %v445
        %v458 = vpack.c.bf16 %v448, %v447
        %v459 = vpack.c.bf16 %v450, %v449
        %v460 = vpack.c.bf16 %v452, %v451
        %v461 = vld [vmem:[%s4] sm:$0x1]
        %v463 = vlaneseq
        %v464 = vshrl.u32 %v463, 7
        %v465 = vsub.s32 0, %v464
        %v466 = vrot.slane %v461, %v465
        %468 = vmatprep.subr.bf16.mxu0 0
        %469 = vmatpush1.bf16.msra.mxu0 %v453
        %470 = vmatprep.subr.bf16.mxu0 0
        %471 = vmatpush1.bf16.msra.mxu0 %v454
        %472 = vmatprep.subr.bf16.mxu0 0
        %473 = vmatpush1.bf16.msra.mxu0 %v455
        %474 = vmatprep.subr.bf16.mxu0 0
        %475 = vmatpush1.bf16.msra.mxu0 %v456
        %476 = vmatprep.subr.bf16.mxu0 0
        %477 = vmatpush1.bf16.msra.mxu0 %v457
        %478 = vmatprep.subr.bf16.mxu0 0
        %479 = vmatpush1.bf16.msra.mxu0 %v458
        %480 = vmatprep.subr.bf16.mxu0 0
        %481 = vmatpush1.bf16.msra.mxu0 %v459
        %482 = vmatprep.subr.bf16.mxu0 0
        %483 = vmatpush1.bf16.msra.mxu0 %v460
        %484 = vmatprep.subr.bf16.mxu0 0
        %485 = vmatpush1.bf16.msra.mxu0 0
        %486 = vmatprep.subr.bf16.mxu0 0
        %487 = vmatpush1.bf16.msra.mxu0 0
        %488 = vmatprep.subr.bf16.mxu0 0
        %489 = vmatpush1.bf16.msra.mxu0 0
        %490 = vmatprep.subr.bf16.mxu0 0
        %491 = vmatpush1.bf16.msra.mxu0 0
        %492 = vmatprep.subr.bf16.mxu0 0
        %493 = vmatpush1.bf16.msra.mxu0 0
        %494 = vmatprep.subr.bf16.mxu0 0
        %495 = vmatpush1.bf16.msra.mxu0 0
        %496 = vmatprep.subr.bf16.mxu0 0
        %497 = vmatpush1.bf16.msra.mxu0 0
        %498 = vmatprep.subr.bf16.mxu0 0
        %499 = vmatpush1.bf16.msra.mxu0 0
        %500 = vmatprep.mubr.bf16.mxu0 0
        %501 = vmatmul.mubr.bf16.gmra.mrb[0].mxu0 %v433
        %v502 = vpop.f32.mrb[0].mxu0
        %v503 = vadd.f32 %v466, %v502
        %v504 = vpop.f32.mrb[0].mxu0
        %v505 = vpop.f32.mrb[0].mxu0
        %v506 = vadd.f32 %v466, %v505
        %v507 = vpop.f32.mrb[0].mxu0
        %508 = vmatprep.mubr.bf16.mxu0 0
        %509 = vmatmul.mubr.bf16.gmra.mrb[0].mxu0 %v434
        %v510 = vpop.f32.mrb[0].mxu0
        %v511 = vadd.f32 %v466, %v510
        %v512 = vpop.f32.mrb[0].mxu0
        %v513 = vpop.f32.mrb[0].mxu0
        %v514 = vadd.f32 %v466, %v513
        %v515 = vpop.f32.mrb[0].mxu0
        %516 = vmatprep.mubr.bf16.mxu0 0
        %517 = vmatmul.mubr.bf16.gmra.mrb[0].mxu0 %v435
        %v518 = vpop.f32.mrb[0].mxu0
        %v519 = vadd.f32 %v466, %v518
        %v520 = vpop.f32.mrb[0].mxu0
        %v521 = vpop.f32.mrb[0].mxu0
        %v522 = vadd.f32 %v466, %v521
        %v523 = vpop.f32.mrb[0].mxu0
        %524 = vmatprep.mubr.bf16.mxu0 0
        %525 = vmatmul.mubr.bf16.gmra.mrb[0].mxu0 %v436
        %v526 = vpop.f32.mrb[0].mxu0
        %v527 = vadd.f32 %v466, %v526
        %v528 = vpop.f32.mrb[0].mxu0
        %v529 = vpop.f32.mrb[0].mxu0
        %v530 = vadd.f32 %v466, %v529
        %v531 = vpop.f32.mrb[0].mxu0
        %532 = vdwg.mxu0
        %v533 = vmax.f32 %v503, 0.0
        %v534 = vmax.f32 %v506, 0.0
        %v535 = vmax.f32 %v511, 0.0
        %v536 = vmax.f32 %v514, 0.0
        %v537 = vmax.f32 %v519, 0.0
        %v538 = vmax.f32 %v522, 0.0
        %v539 = vmax.f32 %v527, 0.0
        %v540 = vmax.f32 %v530, 0.0
        %v541 = vld [vmem:[%s415] sm:$0xff]
        %v542 = vld [vmem:[%s415 + $0x8] sm:$0xff]
        %v543 = vld [vmem:[%s415 + $0x10] sm:$0xff]
        %v544 = vld [vmem:[%s415 + $0x18] sm:$0xff]
        %v545 = vld [vmem:[%s415 + $0x20] sm:$0xff]
        %v546 = vld [vmem:[%s415 + $0x28] sm:$0xff]
        %v547 = vld [vmem:[%s415 + $0x30] sm:$0xff]
        %v548 = vld [vmem:[%s415 + $0x38] sm:$0xff]
        %v549 = vld [vmem:[%s415 + $0x40] sm:$0xff]
        %v550 = vld [vmem:[%s415 + $0x48] sm:$0xff]
        %v551 = vld [vmem:[%s415 + $0x50] sm:$0xff]
        %v552 = vld [vmem:[%s415 + $0x58] sm:$0xff]
        %v553 = vld [vmem:[%s415 + $0x60] sm:$0xff]
        %v554 = vld [vmem:[%s415 + $0x68] sm:$0xff]
        %v555 = vld [vmem:[%s415 + $0x70] sm:$0xff]
        %v556 = vld [vmem:[%s415 + $0x78] sm:$0xff]
        %v557 = vpack.c.bf16 %v542, %v541
        %v558 = vpack.c.bf16 %v544, %v543
        %v559 = vpack.c.bf16 %v546, %v545
        %v560 = vpack.c.bf16 %v548, %v547
        %v561 = vpack.c.bf16 %v550, %v549
        %v562 = vpack.c.bf16 %v552, %v551
        %v563 = vpack.c.bf16 %v554, %v553
        %v564 = vpack.c.bf16 %v556, %v555
        %v565 = vld [vmem:[#allocation5] sm:$0xff]
        %v566 = vld [vmem:[#allocation5 + $0x8] sm:$0xff]
        %v567 = vld [vmem:[#allocation5 + $0x10] sm:$0xff]
        %v568 = vld [vmem:[#allocation5 + $0x18] sm:$0xff]
        %v569 = vld [vmem:[#allocation5 + $0x20] sm:$0xff]
        %v570 = vld [vmem:[#allocation5 + $0x28] sm:$0xff]
        %v571 = vld [vmem:[#allocation5 + $0x30] sm:$0xff]
        %v572 = vld [vmem:[#allocation5 + $0x38] sm:$0xff]
        %v573 = vld [vmem:[#allocation5 + $0x40] sm:$0xff]
        %v574 = vld [vmem:[#allocation5 + $0x48] sm:$0xff]
        %v575 = vld [vmem:[#allocation5 + $0x50] sm:$0xff]
        %v576 = vld [vmem:[#allocation5 + $0x58] sm:$0xff]
        %v577 = vld [vmem:[#allocation5 + $0x60] sm:$0xff]
        %v578 = vld [vmem:[#allocation5 + $0x68] sm:$0xff]
        %v579 = vld [vmem:[#allocation5 + $0x70] sm:$0xff]
        %v580 = vld [vmem:[#allocation5 + $0x78] sm:$0xff]
        %v581 = vpack.c.bf16 %v566, %v565
        %v582 = vpack.c.bf16 %v568, %v567
        %v583 = vpack.c.bf16 %v570, %v569
        %v584 = vpack.c.bf16 %v572, %v571
        %v585 = vpack.c.bf16 %v574, %v573
        %v586 = vpack.c.bf16 %v576, %v575
        %v587 = vpack.c.bf16 %v578, %v577
        %v588 = vpack.c.bf16 %v580, %v579
        %v589 = vld [vmem:[%s6] sm:$0x1]
        %v591 = vlaneseq
        %v592 = vshrl.u32 %v591, 7
        %v593 = vsub.s32 0, %v592
        %v594 = vrot.slane %v589, %v593
        %596 = vmatprep.subr.bf16.mxu0 0
        %597 = vmatpush1.bf16.msra.mxu0 %v581
        %598 = vmatprep.subr.bf16.mxu0 0
        %599 = vmatpush1.bf16.msra.mxu0 %v582
        %600 = vmatprep.subr.bf16.mxu0 0
        %601 = vmatpush1.bf16.msra.mxu0 %v583
        %602 = vmatprep.subr.bf16.mxu0 0
        %603 = vmatpush1.bf16.msra.mxu0 %v584
        %604 = vmatprep.subr.bf16.mxu0 0
        %605 = vmatpush1.bf16.msra.mxu0 %v585
        %606 = vmatprep.subr.bf16.mxu0 0
        %607 = vmatpush1.bf16.msra.mxu0 %v586
        %608 = vmatprep.subr.bf16.mxu0 0
        %609 = vmatpush1.bf16.msra.mxu0 %v587
        %610 = vmatprep.subr.bf16.mxu0 0
        %611 = vmatpush1.bf16.msra.mxu0 %v588
        %612 = vmatprep.subr.bf16.mxu0 0
        %613 = vmatpush1.bf16.msra.mxu0 0
        %614 = vmatprep.subr.bf16.mxu0 0
        %615 = vmatpush1.bf16.msra.mxu0 0
        %616 = vmatprep.subr.bf16.mxu0 0
        %617 = vmatpush1.bf16.msra.mxu0 0
        %618 = vmatprep.subr.bf16.mxu0 0
        %619 = vmatpush1.bf16.msra.mxu0 0
        %620 = vmatprep.subr.bf16.mxu0 0
        %621 = vmatpush1.bf16.msra.mxu0 0
        %622 = vmatprep.subr.bf16.mxu0 0
        %623 = vmatpush1.bf16.msra.mxu0 0
        %624 = vmatprep.subr.bf16.mxu0 0
        %625 = vmatpush1.bf16.msra.mxu0 0
        %626 = vmatprep.subr.bf16.mxu0 0
        %627 = vmatpush1.bf16.msra.mxu0 0
        %628 = vmatprep.mubr.bf16.mxu0 0
        %629 = vmatmul.mubr.bf16.gmra.mrb[0].mxu0 %v557
        %v630 = vpop.f32.mrb[0].mxu0
        %v631 = vadd.f32 %v594, %v630
        %v632 = vpop.f32.mrb[0].mxu0
        %v633 = vpop.f32.mrb[0].mxu0
        %v634 = vadd.f32 %v594, %v633
        %v635 = vpop.f32.mrb[0].mxu0
        %636 = vmatprep.mubr.bf16.mxu0 0
        %637 = vmatmul.mubr.bf16.gmra.mrb[0].mxu0 %v558
        %v638 = vpop.f32.mrb[0].mxu0
        %v639 = vadd.f32 %v594, %v638
        %v640 = vpop.f32.mrb[0].mxu0
        %v641 = vpop.f32.mrb[0].mxu0
        %v642 = vadd.f32 %v594, %v641
        %v643 = vpop.f32.mrb[0].mxu0
        %644 = vmatprep.mubr.bf16.mxu0 0
        %645 = vmatmul.mubr.bf16.gmra.mrb[0].mxu0 %v559
        %v646 = vpop.f32.mrb[0].mxu0
        %v647 = vadd.f32 %v594, %v646
        %v648 = vpop.f32.mrb[0].mxu0
        %v649 = vpop.f32.mrb[0].mxu0
        %v650 = vadd.f32 %v594, %v649
        %v651 = vpop.f32.mrb[0].mxu0
        %652 = vmatprep.mubr.bf16.mxu0 0
        %653 = vmatmul.mubr.bf16.gmra.mrb[0].mxu0 %v560
        %v654 = vpop.f32.mrb[0].mxu0
        %v655 = vadd.f32 %v594, %v654
        %v656 = vpop.f32.mrb[0].mxu0
        %v657 = vpop.f32.mrb[0].mxu0
        %v658 = vadd.f32 %v594, %v657
        %v659 = vpop.f32.mrb[0].mxu0
        %660 = vmatprep.mubr.bf16.mxu0 0
        %661 = vmatmul.mubr.bf16.gmra.mrb[0].mxu0 %v561
        %v662 = vpop.f32.mrb[0].mxu0
        %v663 = vadd.f32 %v594, %v662
        %v664 = vpop.f32.mrb[0].mxu0
        %v665 = vpop.f32.mrb[0].mxu0
        %v666 = vadd.f32 %v594, %v665
        %v667 = vpop.f32.mrb[0].mxu0
        %668 = vmatprep.mubr.bf16.mxu0 0
        %669 = vmatmul.mubr.bf16.gmra.mrb[0].mxu0 %v562
        %v670 = vpop.f32.mrb[0].mxu0
        %v671 = vadd.f32 %v594, %v670
        %v672 = vpop.f32.mrb[0].mxu0
        %v673 = vpop.f32.mrb[0].mxu0
        %v674 = vadd.f32 %v594, %v673
        %v675 = vpop.f32.mrb[0].mxu0
        %676 = vmatprep.mubr.bf16.mxu0 0
        %677 = vmatmul.mubr.bf16.gmra.mrb[0].mxu0 %v563
        %v678 = vpop.f32.mrb[0].mxu0
        %v679 = vadd.f32 %v594, %v678
        %v680 = vpop.f32.mrb[0].mxu0
        %v681 = vpop.f32.mrb[0].mxu0
        %v682 = vadd.f32 %v594, %v681
        %v683 = vpop.f32.mrb[0].mxu0
        %684 = vmatprep.mubr.bf16.mxu0 0
        %685 = vmatmul.mubr.bf16.gmra.mrb[0].mxu0 %v564
        %v686 = vpop.f32.mrb[0].mxu0
        %v687 = vadd.f32 %v594, %v686
        %v688 = vpop.f32.mrb[0].mxu0
        %v689 = vpop.f32.mrb[0].mxu0
        %v690 = vadd.f32 %v594, %v689
        %v691 = vpop.f32.mrb[0].mxu0
        %692 = vdwg.mxu0
        %v693 = vmax.f32 %v631, 0.0
        %v694 = vmax.f32 %v634, 0.0
        %v695 = vmax.f32 %v639, 0.0
        %v696 = vmax.f32 %v642, 0.0
        %v697 = vmax.f32 %v647, 0.0
        %v698 = vmax.f32 %v650, 0.0
        %v699 = vmax.f32 %v655, 0.0
        %v700 = vmax.f32 %v658, 0.0
        %v701 = vmax.f32 %v663, 0.0
        %v702 = vmax.f32 %v666, 0.0
        %v703 = vmax.f32 %v671, 0.0
        %v704 = vmax.f32 %v674, 0.0
        %v705 = vmax.f32 %v679, 0.0
        %v706 = vmax.f32 %v682, 0.0
        %v707 = vmax.f32 %v687, 0.0
        %v708 = vmax.f32 %v690, 0.0
        %v709 = vld [vmem:[%s422] sm:$0xff]
        %v710 = vld [vmem:[%s422 + $0x8] sm:$0xff]
        %v711 = vld [vmem:[%s422 + $0x10] sm:$0xff]
        %v712 = vld [vmem:[%s422 + $0x18] sm:$0xff]
        %v713 = vld [vmem:[%s422 + $0x20] sm:$0xff]
        %v714 = vld [vmem:[%s422 + $0x28] sm:$0xff]
        %v715 = vld [vmem:[%s422 + $0x30] sm:$0xff]
        %v716 = vld [vmem:[%s422 + $0x38] sm:$0xff]
        %v717 = vld [vmem:[%s422 + $0x40] sm:$0xff]
        %v718 = vld [vmem:[%s422 + $0x48] sm:$0xff]
        %v719 = vld [vmem:[%s422 + $0x50] sm:$0xff]
        %v720 = vld [vmem:[%s422 + $0x58] sm:$0xff]
        %v721 = vld [vmem:[%s422 + $0x60] sm:$0xff]
        %v722 = vld [vmem:[%s422 + $0x68] sm:$0xff]
        %v723 = vld [vmem:[%s422 + $0x70] sm:$0xff]
        %v724 = vld [vmem:[%s422 + $0x78] sm:$0xff]
        %725 = vxpose.xlu0.b32.start [1/16] %v709, 128
        %726 = vxpose.xlu0.b32.cont [2/16] %v710, 128
        %727 = vxpose.xlu0.b32.cont [3/16] 0.0, 128
        %728 = vxpose.xlu0.b32.cont [4/16] 0.0, 128
        %729 = vxpose.xlu0.b32.cont [5/16] 0.0, 128
        %730 = vxpose.xlu0.b32.cont [6/16] 0.0, 128
        %731 = vxpose.xlu0.b32.cont [7/16] 0.0, 128
        %732 = vxpose.xlu0.b32.cont [8/16] 0.0, 128
        %733 = vxpose.xlu0.b32.cont [9/16] 0.0, 128
        %734 = vxpose.xlu0.b32.cont [10/16] 0.0, 128
        %735 = vxpose.xlu0.b32.cont [11/16] 0.0, 128
        %736 = vxpose.xlu0.b32.cont [12/16] 0.0, 128
        %737 = vxpose.xlu0.b32.cont [13/16] 0.0, 128
        %738 = vxpose.xlu0.b32.cont [14/16] 0.0, 128
        %739 = vxpose.xlu0.b32.cont [15/16] 0.0, 128
        %740 = vxpose.xlu0.b32.end [16/16] 0.0, 128
        %v741 = vpop.trf.xlu0
        %v742 = vpop.trf.xlu0
        %v743 = vpop.trf.xlu0
        %v744 = vpop.trf.xlu0
        %v745 = vpop.trf.xlu0
        %v746 = vpop.trf.xlu0
        %v747 = vpop.trf.xlu0
        %v748 = vpop.trf.xlu0
        %v749 = vpop.trf.xlu0
        %v750 = vpop.trf.xlu0
        %v751 = vpop.trf.xlu0
        %v752 = vpop.trf.xlu0
        %v753 = vpop.trf.xlu0
        %v754 = vpop.trf.xlu0
        %v755 = vpop.trf.xlu0
        %v756 = vpop.trf.xlu0
        %757 = vxpose.xlu0.b32.start [1/16] %v711, 128
        %758 = vxpose.xlu0.b32.cont [2/16] %v712, 128
        %759 = vxpose.xlu0.b32.cont [3/16] 0.0, 128
        %760 = vxpose.xlu0.b32.cont [4/16] 0.0, 128
        %761 = vxpose.xlu0.b32.cont [5/16] 0.0, 128
        %762 = vxpose.xlu0.b32.cont [6/16] 0.0, 128
        %763 = vxpose.xlu0.b32.cont [7/16] 0.0, 128
        %764 = vxpose.xlu0.b32.cont [8/16] 0.0, 128
        %765 = vxpose.xlu0.b32.cont [9/16] 0.0, 128
        %766 = vxpose.xlu0.b32.cont [10/16] 0.0, 128
        %767 = vxpose.xlu0.b32.cont [11/16] 0.0, 128
        %768 = vxpose.xlu0.b32.cont [12/16] 0.0, 128
        %769 = vxpose.xlu0.b32.cont [13/16] 0.0, 128
        %770 = vxpose.xlu0.b32.cont [14/16] 0.0, 128
        %771 = vxpose.xlu0.b32.cont [15/16] 0.0, 128
        %772 = vxpose.xlu0.b32.end [16/16] 0.0, 128
        %v773 = vpop.trf.xlu0
        %v774 = vpop.trf.xlu0
        %v775 = vpop.trf.xlu0
        %v776 = vpop.trf.xlu0
        %v777 = vpop.trf.xlu0
        %v778 = vpop.trf.xlu0
        %v779 = vpop.trf.xlu0
        %v780 = vpop.trf.xlu0
        %v781 = vpop.trf.xlu0
        %v782 = vpop.trf.xlu0
        %v783 = vpop.trf.xlu0
        %v784 = vpop.trf.xlu0
        %v785 = vpop.trf.xlu0
        %v786 = vpop.trf.xlu0
        %v787 = vpop.trf.xlu0
        %v788 = vpop.trf.xlu0
        %789 = vxpose.xlu0.b32.start [1/16] %v713, 128
        %790 = vxpose.xlu0.b32.cont [2/16] %v714, 128
        %791 = vxpose.xlu0.b32.cont [3/16] 0.0, 128
        %792 = vxpose.xlu0.b32.cont [4/16] 0.0, 128
        %793 = vxpose.xlu0.b32.cont [5/16] 0.0, 128
        %794 = vxpose.xlu0.b32.cont [6/16] 0.0, 128
        %795 = vxpose.xlu0.b32.cont [7/16] 0.0, 128
        %796 = vxpose.xlu0.b32.cont [8/16] 0.0, 128
        %797 = vxpose.xlu0.b32.cont [9/16] 0.0, 128
        %798 = vxpose.xlu0.b32.cont [10/16] 0.0, 128
        %799 = vxpose.xlu0.b32.cont [11/16] 0.0, 128
        %800 = vxpose.xlu0.b32.cont [12/16] 0.0, 128
        %801 = vxpose.xlu0.b32.cont [13/16] 0.0, 128
        %802 = vxpose.xlu0.b32.cont [14/16] 0.0, 128
        %803 = vxpose.xlu0.b32.cont [15/16] 0.0, 128
        %804 = vxpose.xlu0.b32.end [16/16] 0.0, 128
        %v805 = vpop.trf.xlu0
        %v806 = vpop.trf.xlu0
        %v807 = vpop.trf.xlu0
        %v808 = vpop.trf.xlu0
        %v809 = vpop.trf.xlu0
        %v810 = vpop.trf.xlu0
        %v811 = vpop.trf.xlu0
        %v812 = vpop.trf.xlu0
        %v813 = vpop.trf.xlu0
        %v814 = vpop.trf.xlu0
        %v815 = vpop.trf.xlu0
        %v816 = vpop.trf.xlu0
        %v817 = vpop.trf.xlu0
        %v818 = vpop.trf.xlu0
        %v819 = vpop.trf.xlu0
        %v820 = vpop.trf.xlu0
        %821 = vxpose.xlu0.b32.start [1/16] %v715, 128
        %822 = vxpose.xlu0.b32.cont [2/16] %v716, 128
        %823 = vxpose.xlu0.b32.cont [3/16] 0.0, 128
        %824 = vxpose.xlu0.b32.cont [4/16] 0.0, 128
        %825 = vxpose.xlu0.b32.cont [5/16] 0.0, 128
        %826 = vxpose.xlu0.b32.cont [6/16] 0.0, 128
        %827 = vxpose.xlu0.b32.cont [7/16] 0.0, 128
        %828 = vxpose.xlu0.b32.cont [8/16] 0.0, 128
        %829 = vxpose.xlu0.b32.cont [9/16] 0.0, 128
        %830 = vxpose.xlu0.b32.cont [10/16] 0.0, 128
        %831 = vxpose.xlu0.b32.cont [11/16] 0.0, 128
        %832 = vxpose.xlu0.b32.cont [12/16] 0.0, 128
        %833 = vxpose.xlu0.b32.cont [13/16] 0.0, 128
        %834 = vxpose.xlu0.b32.cont [14/16] 0.0, 128
        %835 = vxpose.xlu0.b32.cont [15/16] 0.0, 128
        %836 = vxpose.xlu0.b32.end [16/16] 0.0, 128
        %v837 = vpop.trf.xlu0
        %v838 = vpop.trf.xlu0
        %v839 = vpop.trf.xlu0
        %v840 = vpop.trf.xlu0
        %v841 = vpop.trf.xlu0
        %v842 = vpop.trf.xlu0
        %v843 = vpop.trf.xlu0
        %v844 = vpop.trf.xlu0
        %v845 = vpop.trf.xlu0
        %v846 = vpop.trf.xlu0
        %v847 = vpop.trf.xlu0
        %v848 = vpop.trf.xlu0
        %v849 = vpop.trf.xlu0
        %v850 = vpop.trf.xlu0
        %v851 = vpop.trf.xlu0
        %v852 = vpop.trf.xlu0
        %853 = vxpose.xlu0.b32.start [1/16] %v717, 128
        %854 = vxpose.xlu0.b32.cont [2/16] %v718, 128
        %855 = vxpose.xlu0.b32.cont [3/16] 0.0, 128
        %856 = vxpose.xlu0.b32.cont [4/16] 0.0, 128
        %857 = vxpose.xlu0.b32.cont [5/16] 0.0, 128
        %858 = vxpose.xlu0.b32.cont [6/16] 0.0, 128
        %859 = vxpose.xlu0.b32.cont [7/16] 0.0, 128
        %860 = vxpose.xlu0.b32.cont [8/16] 0.0, 128
        %861 = vxpose.xlu0.b32.cont [9/16] 0.0, 128
        %862 = vxpose.xlu0.b32.cont [10/16] 0.0, 128
        %863 = vxpose.xlu0.b32.cont [11/16] 0.0, 128
        %864 = vxpose.xlu0.b32.cont [12/16] 0.0, 128
        %865 = vxpose.xlu0.b32.cont [13/16] 0.0, 128
        %866 = vxpose.xlu0.b32.cont [14/16] 0.0, 128
        %867 = vxpose.xlu0.b32.cont [15/16] 0.0, 128
        %868 = vxpose.xlu0.b32.end [16/16] 0.0, 128
        %v869 = vpop.trf.xlu0
        %v870 = vpop.trf.xlu0
        %v871 = vpop.trf.xlu0
        %v872 = vpop.trf.xlu0
        %v873 = vpop.trf.xlu0
        %v874 = vpop.trf.xlu0
        %v875 = vpop.trf.xlu0
        %v876 = vpop.trf.xlu0
        %v877 = vpop.trf.xlu0
        %v878 = vpop.trf.xlu0
        %v879 = vpop.trf.xlu0
        %v880 = vpop.trf.xlu0
        %v881 = vpop.trf.xlu0
        %v882 = vpop.trf.xlu0
        %v883 = vpop.trf.xlu0
        %v884 = vpop.trf.xlu0
        %885 = vxpose.xlu0.b32.start [1/16] %v719, 128
        %886 = vxpose.xlu0.b32.cont [2/16] %v720, 128
        %887 = vxpose.xlu0.b32.cont [3/16] 0.0, 128
        %888 = vxpose.xlu0.b32.cont [4/16] 0.0, 128
        %889 = vxpose.xlu0.b32.cont [5/16] 0.0, 128
        %890 = vxpose.xlu0.b32.cont [6/16] 0.0, 128
        %891 = vxpose.xlu0.b32.cont [7/16] 0.0, 128
        %892 = vxpose.xlu0.b32.cont [8/16] 0.0, 128
        %893 = vxpose.xlu0.b32.cont [9/16] 0.0, 128
        %894 = vxpose.xlu0.b32.cont [10/16] 0.0, 128
        %895 = vxpose.xlu0.b32.cont [11/16] 0.0, 128
        %896 = vxpose.xlu0.b32.cont [12/16] 0.0, 128
        %897 = vxpose.xlu0.b32.cont [13/16] 0.0, 128
        %898 = vxpose.xlu0.b32.cont [14/16] 0.0, 128
        %899 = vxpose.xlu0.b32.cont [15/16] 0.0, 128
        %900 = vxpose.xlu0.b32.end [16/16] 0.0, 128
        %v901 = vpop.trf.xlu0
        %v902 = vpop.trf.xlu0
        %v903 = vpop.trf.xlu0
        %v904 = vpop.trf.xlu0
        %v905 = vpop.trf.xlu0
        %v906 = vpop.trf.xlu0
        %v907 = vpop.trf.xlu0
        %v908 = vpop.trf.xlu0
        %v909 = vpop.trf.xlu0
        %v910 = vpop.trf.xlu0
        %v911 = vpop.trf.xlu0
        %v912 = vpop.trf.xlu0
        %v913 = vpop.trf.xlu0
        %v914 = vpop.trf.xlu0
        %v915 = vpop.trf.xlu0
        %v916 = vpop.trf.xlu0
        %917 = vxpose.xlu0.b32.start [1/16] %v721, 128
        %918 = vxpose.xlu0.b32.cont [2/16] %v722, 128
        %919 = vxpose.xlu0.b32.cont [3/16] 0.0, 128
        %920 = vxpose.xlu0.b32.cont [4/16] 0.0, 128
        %921 = vxpose.xlu0.b32.cont [5/16] 0.0, 128
        %922 = vxpose.xlu0.b32.cont [6/16] 0.0, 128
        %923 = vxpose.xlu0.b32.cont [7/16] 0.0, 128
        %924 = vxpose.xlu0.b32.cont [8/16] 0.0, 128
        %925 = vxpose.xlu0.b32.cont [9/16] 0.0, 128
        %926 = vxpose.xlu0.b32.cont [10/16] 0.0, 128
        %927 = vxpose.xlu0.b32.cont [11/16] 0.0, 128
        %928 = vxpose.xlu0.b32.cont [12/16] 0.0, 128
        %929 = vxpose.xlu0.b32.cont [13/16] 0.0, 128
        %930 = vxpose.xlu0.b32.cont [14/16] 0.0, 128
        %931 = vxpose.xlu0.b32.cont [15/16] 0.0, 128
        %932 = vxpose.xlu0.b32.end [16/16] 0.0, 128
        %v933 = vpop.trf.xlu0
        %v934 = vpop.trf.xlu0
        %v935 = vpop.trf.xlu0
        %v936 = vpop.trf.xlu0
        %v937 = vpop.trf.xlu0
        %v938 = vpop.trf.xlu0
        %v939 = vpop.trf.xlu0
        %v940 = vpop.trf.xlu0
        %v941 = vpop.trf.xlu0
        %v942 = vpop.trf.xlu0
        %v943 = vpop.trf.xlu0
        %v944 = vpop.trf.xlu0
        %v945 = vpop.trf.xlu0
        %v946 = vpop.trf.xlu0
        %v947 = vpop.trf.xlu0
        %v948 = vpop.trf.xlu0
        %949 = vxpose.xlu0.b32.start [1/16] %v723, 128
        %950 = vxpose.xlu0.b32.cont [2/16] %v724, 128
        %951 = vxpose.xlu0.b32.cont [3/16] 0.0, 128
        %952 = vxpose.xlu0.b32.cont [4/16] 0.0, 128
        %953 = vxpose.xlu0.b32.cont [5/16] 0.0, 128
        %954 = vxpose.xlu0.b32.cont [6/16] 0.0, 128
        %955 = vxpose.xlu0.b32.cont [7/16] 0.0, 128
        %956 = vxpose.xlu0.b32.cont [8/16] 0.0, 128
        %957 = vxpose.xlu0.b32.cont [9/16] 0.0, 128
        %958 = vxpose.xlu0.b32.cont [10/16] 0.0, 128
        %959 = vxpose.xlu0.b32.cont [11/16] 0.0, 128
        %960 = vxpose.xlu0.b32.cont [12/16] 0.0, 128
        %961 = vxpose.xlu0.b32.cont [13/16] 0.0, 128
        %962 = vxpose.xlu0.b32.cont [14/16] 0.0, 128
        %963 = vxpose.xlu0.b32.cont [15/16] 0.0, 128
        %964 = vxpose.xlu0.b32.end [16/16] 0.0, 128
        %v965 = vpop.trf.xlu0
        %v966 = vpop.trf.xlu0
        %v967 = vpop.trf.xlu0
        %v968 = vpop.trf.xlu0
        %v969 = vpop.trf.xlu0
        %v970 = vpop.trf.xlu0
        %v971 = vpop.trf.xlu0
        %v972 = vpop.trf.xlu0
        %v973 = vpop.trf.xlu0
        %v974 = vpop.trf.xlu0
        %v975 = vpop.trf.xlu0
        %v976 = vpop.trf.xlu0
        %v977 = vpop.trf.xlu0
        %v978 = vpop.trf.xlu0
        %v979 = vpop.trf.xlu0
        %v980 = vpop.trf.xlu0
        %v981 = vpack.c.bf16 %v741, %v741
        %v982 = vpack.c.bf16 %v773, %v773
        %v983 = vpack.c.bf16 %v805, %v805
        %v984 = vpack.c.bf16 %v837, %v837
        %v985 = vpack.c.bf16 %v869, %v869
        %v986 = vpack.c.bf16 %v901, %v901
        %v987 = vpack.c.bf16 %v933, %v933
        %v988 = vpack.c.bf16 %v965, %v965
        %v989 = vpack.c.bf16 %v694, %v693
        %v990 = vpack.c.bf16 %v696, %v695
        %v991 = vpack.c.bf16 %v698, %v697
        %v992 = vpack.c.bf16 %v700, %v699
        %v993 = vpack.c.bf16 %v702, %v701
        %v994 = vpack.c.bf16 %v704, %v703
        %v995 = vpack.c.bf16 %v706, %v705
        %v996 = vpack.c.bf16 %v708, %v707
        %vm997 = vcmask 130048
        %v999 = vsel %vm997, %v981, 0
        %1001 = vmatprep.subr.bf16.mxu0 0
        %1002 = vmatpush1.bf16.msra.mxu0 %v989
        %1003 = vmatprep.subr.bf16.mxu0 0
        %1004 = vmatpush1.bf16.msra.mxu0 0
        %1005 = vmatprep.subr.bf16.mxu0 0
        %1006 = vmatpush1.bf16.msra.mxu0 0
        %1007 = vmatprep.subr.bf16.mxu0 0
        %1008 = vmatpush1.bf16.msra.mxu0 0
        %1009 = vmatprep.subr.bf16.mxu0 0
        %1010 = vmatpush1.bf16.msra.mxu0 0
        %1011 = vmatprep.subr.bf16.mxu0 0
        %1012 = vmatpush1.bf16.msra.mxu0 0
        %1013 = vmatprep.subr.bf16.mxu0 0
        %1014 = vmatpush1.bf16.msra.mxu0 0
        %1015 = vmatprep.subr.bf16.mxu0 0
        %1016 = vmatpush1.bf16.msra.mxu0 0
        %1017 = vmatprep.subr.bf16.mxu0 0
        %1018 = vmatpush1.bf16.msra.mxu0 0
        %1019 = vmatprep.subr.bf16.mxu0 0
        %1020 = vmatpush1.bf16.msra.mxu0 0
        %1021 = vmatprep.subr.bf16.mxu0 0
        %1022 = vmatpush1.bf16.msra.mxu0 0
        %1023 = vmatprep.subr.bf16.mxu0 0
        %1024 = vmatpush1.bf16.msra.mxu0 0
        %1025 = vmatprep.subr.bf16.mxu0 0
        %1026 = vmatpush1.bf16.msra.mxu0 0
        %1027 = vmatprep.subr.bf16.mxu0 0
        %1028 = vmatpush1.bf16.msra.mxu0 0
        %1029 = vmatprep.subr.bf16.mxu0 0
        %1030 = vmatpush1.bf16.msra.mxu0 0
        %1031 = vmatprep.subr.bf16.mxu0 0
        %1032 = vmatpush1.bf16.msra.mxu0 0
        %1033 = vmatprep.mubr.bf16.mxu0 0
        %1034 = vmatmul.mubr.bf16.gmra.mrb[0].mxu0 %v999
        %v1035 = vpop.f32.mrb[0].mxu0
        %v1036 = vadd.f32 0.0, %v1035
        %v1037 = vpop.f32.mrb[0].mxu0
        %v1038 = vpop.f32.mrb[0].mxu0
        %v1039 = vpop.f32.mrb[0].mxu0
        %1040 = vdwg.mxu0
        %v1042 = vsel %vm997, %v982, 0
        %1044 = vmatprep.subr.bf16.mxu0 0
        %1045 = vmatpush1.bf16.msra.mxu0 %v990
        %1046 = vmatprep.subr.bf16.mxu0 0
        %1047 = vmatpush1.bf16.msra.mxu0 0
        %1048 = vmatprep.subr.bf16.mxu0 0
        %1049 = vmatpush1.bf16.msra.mxu0 0
        %1050 = vmatprep.subr.bf16.mxu0 0
        %1051 = vmatpush1.bf16.msra.mxu0 0
        %1052 = vmatprep.subr.bf16.mxu0 0
        %1053 = vmatpush1.bf16.msra.mxu0 0
        %1054 = vmatprep.subr.bf16.mxu0 0
        %1055 = vmatpush1.bf16.msra.mxu0 0
        %1056 = vmatprep.subr.bf16.mxu0 0
        %1057 = vmatpush1.bf16.msra.mxu0 0
        %1058 = vmatprep.subr.bf16.mxu0 0
        %1059 = vmatpush1.bf16.msra.mxu0 0
        %1060 = vmatprep.subr.bf16.mxu0 0
        %1061 = vmatpush1.bf16.msra.mxu0 0
        %1062 = vmatprep.subr.bf16.mxu0 0
        %1063 = vmatpush1.bf16.msra.mxu0 0
        %1064 = vmatprep.subr.bf16.mxu0 0
        %1065 = vmatpush1.bf16.msra.mxu0 0
        %1066 = vmatprep.subr.bf16.mxu0 0
        %1067 = vmatpush1.bf16.msra.mxu0 0
        %1068 = vmatprep.subr.bf16.mxu0 0
        %1069 = vmatpush1.bf16.msra.mxu0 0
        %1070 = vmatprep.subr.bf16.mxu0 0
        %1071 = vmatpush1.bf16.msra.mxu0 0
        %1072 = vmatprep.subr.bf16.mxu0 0
        %1073 = vmatpush1.bf16.msra.mxu0 0
        %1074 = vmatprep.subr.bf16.mxu0 0
        %1075 = vmatpush1.bf16.msra.mxu0 0
        %1076 = vmatprep.mubr.bf16.mxu0 0
        %1077 = vmatmul.mubr.bf16.gmra.mrb[0].mxu0 %v1042
        %v1078 = vpop.f32.mrb[0].mxu0
        %v1079 = vadd.f32 0.0, %v1078
        %v1080 = vpop.f32.mrb[0].mxu0
        %v1081 = vpop.f32.mrb[0].mxu0
        %v1082 = vpop.f32.mrb[0].mxu0
        %1083 = vdwg.mxu0
        %v1085 = vsel %vm997, %v983, 0
        %1087 = vmatprep.subr.bf16.mxu0 0
        %1088 = vmatpush1.bf16.msra.mxu0 %v991
        %1089 = vmatprep.subr.bf16.mxu0 0
        %1090 = vmatpush1.bf16.msra.mxu0 0
        %1091 = vmatprep.subr.bf16.mxu0 0
        %1092 = vmatpush1.bf16.msra.mxu0 0
        %1093 = vmatprep.subr.bf16.mxu0 0
        %1094 = vmatpush1.bf16.msra.mxu0 0
        %1095 = vmatprep.subr.bf16.mxu0 0
        %1096 = vmatpush1.bf16.msra.mxu0 0
        %1097 = vmatprep.subr.bf16.mxu0 0
        %1098 = vmatpush1.bf16.msra.mxu0 0
        %1099 = vmatprep.subr.bf16.mxu0 0
        %1100 = vmatpush1.bf16.msra.mxu0 0
        %1101 = vmatprep.subr.bf16.mxu0 0
        %1102 = vmatpush1.bf16.msra.mxu0 0
        %1103 = vmatprep.subr.bf16.mxu0 0
        %1104 = vmatpush1.bf16.msra.mxu0 0
        %1105 = vmatprep.subr.bf16.mxu0 0
        %1106 = vmatpush1.bf16.msra.mxu0 0
        %1107 = vmatprep.subr.bf16.mxu0 0
        %1108 = vmatpush1.bf16.msra.mxu0 0
        %1109 = vmatprep.subr.bf16.mxu0 0
        %1110 = vmatpush1.bf16.msra.mxu0 0
        %1111 = vmatprep.subr.bf16.mxu0 0
        %1112 = vmatpush1.bf16.msra.mxu0 0
        %1113 = vmatprep.subr.bf16.mxu0 0
        %1114 = vmatpush1.bf16.msra.mxu0 0
        %1115 = vmatprep.subr.bf16.mxu0 0
        %1116 = vmatpush1.bf16.msra.mxu0 0
        %1117 = vmatprep.subr.bf16.mxu0 0
        %1118 = vmatpush1.bf16.msra.mxu0 0
        %1119 = vmatprep.mubr.bf16.mxu0 0
        %1120 = vmatmul.mubr.bf16.gmra.mrb[0].mxu0 %v1085
        %v1121 = vpop.f32.mrb[0].mxu0
        %v1122 = vadd.f32 0.0, %v1121
        %v1123 = vpop.f32.mrb[0].mxu0
        %v1124 = vpop.f32.mrb[0].mxu0
        %v1125 = vpop.f32.mrb[0].mxu0
        %1126 = vdwg.mxu0
        %v1128 = vsel %vm997, %v984, 0
        %1130 = vmatprep.subr.bf16.mxu0 0
        %1131 = vmatpush1.bf16.msra.mxu0 %v992
        %1132 = vmatprep.subr.bf16.mxu0 0
        %1133 = vmatpush1.bf16.msra.mxu0 0
        %1134 = vmatprep.subr.bf16.mxu0 0
        %1135 = vmatpush1.bf16.msra.mxu0 0
        %1136 = vmatprep.subr.bf16.mxu0 0
        %1137 = vmatpush1.bf16.msra.mxu0 0
        %1138 = vmatprep.subr.bf16.mxu0 0
        %1139 = vmatpush1.bf16.msra.mxu0 0
        %1140 = vmatprep.subr.bf16.mxu0 0
        %1141 = vmatpush1.bf16.msra.mxu0 0
        %1142 = vmatprep.subr.bf16.mxu0 0
        %1143 = vmatpush1.bf16.msra.mxu0 0
        %1144 = vmatprep.subr.bf16.mxu0 0
        %1145 = vmatpush1.bf16.msra.mxu0 0
        %1146 = vmatprep.subr.bf16.mxu0 0
        %1147 = vmatpush1.bf16.msra.mxu0 0
        %1148 = vmatprep.subr.bf16.mxu0 0
        %1149 = vmatpush1.bf16.msra.mxu0 0
        %1150 = vmatprep.subr.bf16.mxu0 0
        %1151 = vmatpush1.bf16.msra.mxu0 0
        %1152 = vmatprep.subr.bf16.mxu0 0
        %1153 = vmatpush1.bf16.msra.mxu0 0
        %1154 = vmatprep.subr.bf16.mxu0 0
        %1155 = vmatpush1.bf16.msra.mxu0 0
        %1156 = vmatprep.subr.bf16.mxu0 0
        %1157 = vmatpush1.bf16.msra.mxu0 0
        %1158 = vmatprep.subr.bf16.mxu0 0
        %1159 = vmatpush1.bf16.msra.mxu0 0
        %1160 = vmatprep.subr.bf16.mxu0 0
        %1161 = vmatpush1.bf16.msra.mxu0 0
        %1162 = vmatprep.mubr.bf16.mxu0 0
        %1163 = vmatmul.mubr.bf16.gmra.mrb[0].mxu0 %v1128
        %v1164 = vpop.f32.mrb[0].mxu0
        %v1165 = vadd.f32 0.0, %v1164
        %v1166 = vpop.f32.mrb[0].mxu0
        %v1167 = vpop.f32.mrb[0].mxu0
        %v1168 = vpop.f32.mrb[0].mxu0
        %1169 = vdwg.mxu0
        %v1171 = vsel %vm997, %v985, 0
        %1173 = vmatprep.subr.bf16.mxu0 0
        %1174 = vmatpush1.bf16.msra.mxu0 %v993
        %1175 = vmatprep.subr.bf16.mxu0 0
        %1176 = vmatpush1.bf16.msra.mxu0 0
        %1177 = vmatprep.subr.bf16.mxu0 0
        %1178 = vmatpush1.bf16.msra.mxu0 0
        %1179 = vmatprep.subr.bf16.mxu0 0
        %1180 = vmatpush1.bf16.msra.mxu0 0
        %1181 = vmatprep.subr.bf16.mxu0 0
        %1182 = vmatpush1.bf16.msra.mxu0 0
        %1183 = vmatprep.subr.bf16.mxu0 0
        %1184 = vmatpush1.bf16.msra.mxu0 0
        %1185 = vmatprep.subr.bf16.mxu0 0
        %1186 = vmatpush1.bf16.msra.mxu0 0
        %1187 = vmatprep.subr.bf16.mxu0 0
        %1188 = vmatpush1.bf16.msra.mxu0 0
        %1189 = vmatprep.subr.bf16.mxu0 0
        %1190 = vmatpush1.bf16.msra.mxu0 0
        %1191 = vmatprep.subr.bf16.mxu0 0
        %1192 = vmatpush1.bf16.msra.mxu0 0
        %1193 = vmatprep.subr.bf16.mxu0 0
        %1194 = vmatpush1.bf16.msra.mxu0 0
        %1195 = vmatprep.subr.bf16.mxu0 0
        %1196 = vmatpush1.bf16.msra.mxu0 0
        %1197 = vmatprep.subr.bf16.mxu0 0
        %1198 = vmatpush1.bf16.msra.mxu0 0
        %1199 = vmatprep.subr.bf16.mxu0 0
        %1200 = vmatpush1.bf16.msra.mxu0 0
        %1201 = vmatprep.subr.bf16.mxu0 0
        %1202 = vmatpush1.bf16.msra.mxu0 0
        %1203 = vmatprep.subr.bf16.mxu0 0
        %1204 = vmatpush1.bf16.msra.mxu0 0
        %1205 = vmatprep.mubr.bf16.mxu0 0
        %1206 = vmatmul.mubr.bf16.gmra.mrb[0].mxu0 %v1171
        %v1207 = vpop.f32.mrb[0].mxu0
        %v1208 = vadd.f32 0.0, %v1207
        %v1209 = vpop.f32.mrb[0].mxu0
        %v1210 = vpop.f32.mrb[0].mxu0
        %v1211 = vpop.f32.mrb[0].mxu0
        %1212 = vdwg.mxu0
        %v1214 = vsel %vm997, %v986, 0
        %1216 = vmatprep.subr.bf16.mxu0 0
        %1217 = vmatpush1.bf16.msra.mxu0 %v994
        %1218 = vmatprep.subr.bf16.mxu0 0
        %1219 = vmatpush1.bf16.msra.mxu0 0
        %1220 = vmatprep.subr.bf16.mxu0 0
        %1221 = vmatpush1.bf16.msra.mxu0 0
        %1222 = vmatprep.subr.bf16.mxu0 0
        %1223 = vmatpush1.bf16.msra.mxu0 0
        %1224 = vmatprep.subr.bf16.mxu0 0
        %1225 = vmatpush1.bf16.msra.mxu0 0
        %1226 = vmatprep.subr.bf16.mxu0 0
        %1227 = vmatpush1.bf16.msra.mxu0 0
        %1228 = vmatprep.subr.bf16.mxu0 0
        %1229 = vmatpush1.bf16.msra.mxu0 0
        %1230 = vmatprep.subr.bf16.mxu0 0
        %1231 = vmatpush1.bf16.msra.mxu0 0
        %1232 = vmatprep.subr.bf16.mxu0 0
        %1233 = vmatpush1.bf16.msra.mxu0 0
        %1234 = vmatprep.subr.bf16.mxu0 0
        %1235 = vmatpush1.bf16.msra.mxu0 0
        %1236 = vmatprep.subr.bf16.mxu0 0
        %1237 = vmatpush1.bf16.msra.mxu0 0
        %1238 = vmatprep.subr.bf16.mxu0 0
        %1239 = vmatpush1.bf16.msra.mxu0 0
        %1240 = vmatprep.subr.bf16.mxu0 0
        %1241 = vmatpush1.bf16.msra.mxu0 0
        %1242 = vmatprep.subr.bf16.mxu0 0
        %1243 = vmatpush1.bf16.msra.mxu0 0
        %1244 = vmatprep.subr.bf16.mxu0 0
        %1245 = vmatpush1.bf16.msra.mxu0 0
        %1246 = vmatprep.subr.bf16.mxu0 0
        %1247 = vmatpush1.bf16.msra.mxu0 0
        %1248 = vmatprep.mubr.bf16.mxu0 0
        %1249 = vmatmul.mubr.bf16.gmra.mrb[0].mxu0 %v1214
        %v1250 = vpop.f32.mrb[0].mxu0
        %v1251 = vadd.f32 0.0, %v1250
        %v1252 = vpop.f32.mrb[0].mxu0
        %v1253 = vpop.f32.mrb[0].mxu0
        %v1254 = vpop.f32.mrb[0].mxu0
        %1255 = vdwg.mxu0
        %v1257 = vsel %vm997, %v987, 0
        %1259 = vmatprep.subr.bf16.mxu0 0
        %1260 = vmatpush1.bf16.msra.mxu0 %v995
        %1261 = vmatprep.subr.bf16.mxu0 0
        %1262 = vmatpush1.bf16.msra.mxu0 0
        %1263 = vmatprep.subr.bf16.mxu0 0
        %1264 = vmatpush1.bf16.msra.mxu0 0
        %1265 = vmatprep.subr.bf16.mxu0 0
        %1266 = vmatpush1.bf16.msra.mxu0 0
        %1267 = vmatprep.subr.bf16.mxu0 0
        %1268 = vmatpush1.bf16.msra.mxu0 0
        %1269 = vmatprep.subr.bf16.mxu0 0
        %1270 = vmatpush1.bf16.msra.mxu0 0
        %1271 = vmatprep.subr.bf16.mxu0 0
        %1272 = vmatpush1.bf16.msra.mxu0 0
        %1273 = vmatprep.subr.bf16.mxu0 0
        %1274 = vmatpush1.bf16.msra.mxu0 0
        %1275 = vmatprep.subr.bf16.mxu0 0
        %1276 = vmatpush1.bf16.msra.mxu0 0
        %1277 = vmatprep.subr.bf16.mxu0 0
        %1278 = vmatpush1.bf16.msra.mxu0 0
        %1279 = vmatprep.subr.bf16.mxu0 0
        %1280 = vmatpush1.bf16.msra.mxu0 0
        %1281 = vmatprep.subr.bf16.mxu0 0
        %1282 = vmatpush1.bf16.msra.mxu0 0
        %1283 = vmatprep.subr.bf16.mxu0 0
        %1284 = vmatpush1.bf16.msra.mxu0 0
        %1285 = vmatprep.subr.bf16.mxu0 0
        %1286 = vmatpush1.bf16.msra.mxu0 0
        %1287 = vmatprep.subr.bf16.mxu0 0
        %1288 = vmatpush1.bf16.msra.mxu0 0
        %1289 = vmatprep.subr.bf16.mxu0 0
        %1290 = vmatpush1.bf16.msra.mxu0 0
        %1291 = vmatprep.mubr.bf16.mxu0 0
        %1292 = vmatmul.mubr.bf16.gmra.mrb[0].mxu0 %v1257
        %v1293 = vpop.f32.mrb[0].mxu0
        %v1294 = vadd.f32 0.0, %v1293
        %v1295 = vpop.f32.mrb[0].mxu0
        %v1296 = vpop.f32.mrb[0].mxu0
        %v1297 = vpop.f32.mrb[0].mxu0
        %1298 = vdwg.mxu0
        %v1300 = vsel %vm997, %v988, 0
        %1302 = vmatprep.subr.bf16.mxu0 0
        %1303 = vmatpush1.bf16.msra.mxu0 %v996
        %1304 = vmatprep.subr.bf16.mxu0 0
        %1305 = vmatpush1.bf16.msra.mxu0 0
        %1306 = vmatprep.subr.bf16.mxu0 0
        %1307 = vmatpush1.bf16.msra.mxu0 0
        %1308 = vmatprep.subr.bf16.mxu0 0
        %1309 = vmatpush1.bf16.msra.mxu0 0
        %1310 = vmatprep.subr.bf16.mxu0 0
        %1311 = vmatpush1.bf16.msra.mxu0 0
        %1312 = vmatprep.subr.bf16.mxu0 0
        %1313 = vmatpush1.bf16.msra.mxu0 0
        %1314 = vmatprep.subr.bf16.mxu0 0
        %1315 = vmatpush1.bf16.msra.mxu0 0
        %1316 = vmatprep.subr.bf16.mxu0 0
        %1317 = vmatpush1.bf16.msra.mxu0 0
        %1318 = vmatprep.subr.bf16.mxu0 0
        %1319 = vmatpush1.bf16.msra.mxu0 0
        %1320 = vmatprep.subr.bf16.mxu0 0
        %1321 = vmatpush1.bf16.msra.mxu0 0
        %1322 = vmatprep.subr.bf16.mxu0 0
        %1323 = vmatpush1.bf16.msra.mxu0 0
        %1324 = vmatprep.subr.bf16.mxu0 0
        %1325 = vmatpush1.bf16.msra.mxu0 0
        %1326 = vmatprep.subr.bf16.mxu0 0
        %1327 = vmatpush1.bf16.msra.mxu0 0
        %1328 = vmatprep.subr.bf16.mxu0 0
        %1329 = vmatpush1.bf16.msra.mxu0 0
        %1330 = vmatprep.subr.bf16.mxu0 0
        %1331 = vmatpush1.bf16.msra.mxu0 0
        %1332 = vmatprep.subr.bf16.mxu0 0
        %1333 = vmatpush1.bf16.msra.mxu0 0
        %1334 = vmatprep.mubr.bf16.mxu0 0
        %1335 = vmatmul.mubr.bf16.gmra.mrb[0].mxu0 %v1300
        %v1336 = vpop.f32.mrb[0].mxu0
        %v1337 = vadd.f32 0.0, %v1336
        %v1338 = vpop.f32.mrb[0].mxu0
        %v1339 = vpop.f32.mrb[0].mxu0
        %v1340 = vpop.f32.mrb[0].mxu0
        %1341 = vdwg.mxu0
        %v1342 = vmul.f32 %v1036, %v533
        %v1343 = vmul.f32 %v1079, %v534
        %v1344 = vmul.f32 %v1122, %v535
        %v1345 = vmul.f32 %v1165, %v536
        %v1346 = vmul.f32 %v1208, %v537
        %v1347 = vmul.f32 %v1251, %v538
        %v1348 = vmul.f32 %v1294, %v539
        %v1349 = vmul.f32 %v1337, %v540
        %v1350 = vrot.slane %v1342, 4
        %v1351 = vadd.f32 %v1342, %v1350
        %v1352 = vrot.slane %v1351, 2
        %v1353 = vadd.f32 %v1351, %v1352
        %v1354 = vrot.slane %v1353, 1
        %v1355 = vadd.f32 %v1353, %v1354
        %v1356 = vrot.slane %v1343, 4
        %v1357 = vadd.f32 %v1343, %v1356
        %v1358 = vrot.slane %v1357, 2
        %v1359 = vadd.f32 %v1357, %v1358
        %v1360 = vrot.slane %v1359, 1
        %v1361 = vadd.f32 %v1359, %v1360
        %v1362 = vrot.slane %v1344, 4
        %v1363 = vadd.f32 %v1344, %v1362
        %v1364 = vrot.slane %v1363, 2
        %v1365 = vadd.f32 %v1363, %v1364
        %v1366 = vrot.slane %v1365, 1
        %v1367 = vadd.f32 %v1365, %v1366
        %v1368 = vrot.slane %v1345, 4
        %v1369 = vadd.f32 %v1345, %v1368
        %v1370 = vrot.slane %v1369, 2
        %v1371 = vadd.f32 %v1369, %v1370
        %v1372 = vrot.slane %v1371, 1
        %v1373 = vadd.f32 %v1371, %v1372
        %v1374 = vrot.slane %v1346, 4
        %v1375 = vadd.f32 %v1346, %v1374
        %v1376 = vrot.slane %v1375, 2
        %v1377 = vadd.f32 %v1375, %v1376
        %v1378 = vrot.slane %v1377, 1
        %v1379 = vadd.f32 %v1377, %v1378
        %v1380 = vrot.slane %v1347, 4
        %v1381 = vadd.f32 %v1347, %v1380
        %v1382 = vrot.slane %v1381, 2
        %v1383 = vadd.f32 %v1381, %v1382
        %v1384 = vrot.slane %v1383, 1
        %v1385 = vadd.f32 %v1383, %v1384
        %v1386 = vrot.slane %v1348, 4
        %v1387 = vadd.f32 %v1348, %v1386
        %v1388 = vrot.slane %v1387, 2
        %v1389 = vadd.f32 %v1387, %v1388
        %v1390 = vrot.slane %v1389, 1
        %v1391 = vadd.f32 %v1389, %v1390
        %v1392 = vrot.slane %v1349, 4
        %v1393 = vadd.f32 %v1349, %v1392
        %v1394 = vrot.slane %v1393, 2
        %v1395 = vadd.f32 %v1393, %v1394
        %v1396 = vrot.slane %v1395, 1
        %v1397 = vadd.f32 %v1395, %v1396
        %v1398 = vpack.c.bf16 %v1355, %v1355
        %v1399 = vpack.c.bf16 %v1361, %v1361
        %v1400 = vpack.c.bf16 %v1367, %v1367
        %v1401 = vpack.c.bf16 %v1373, %v1373
        %v1402 = vpack.c.bf16 %v1379, %v1379
        %v1403 = vpack.c.bf16 %v1385, %v1385
        %v1404 = vpack.c.bf16 %v1391, %v1391
        %v1405 = vpack.c.bf16 %v1397, %v1397
        %v1406 = vld [vmem:[#allocation7] sm:$0xff]
        %v1407 = vld [vmem:[#allocation7 + $0x8] sm:$0xff]
        %v1408 = vld [vmem:[#allocation7 + $0x10] sm:$0xff]
        %v1409 = vld [vmem:[#allocation7 + $0x18] sm:$0xff]
        %v1410 = vld [vmem:[#allocation7 + $0x20] sm:$0xff]
        %v1411 = vld [vmem:[#allocation7 + $0x28] sm:$0xff]
        %v1412 = vld [vmem:[#allocation7 + $0x30] sm:$0xff]
        %v1413 = vld [vmem:[#allocation7 + $0x38] sm:$0xff]
        %v1414 = vld [vmem:[#allocation7 + $0x40] sm:$0xff]
        %v1415 = vld [vmem:[#allocation7 + $0x48] sm:$0xff]
        %v1416 = vld [vmem:[#allocation7 + $0x50] sm:$0xff]
        %v1417 = vld [vmem:[#allocation7 + $0x58] sm:$0xff]
        %v1418 = vld [vmem:[#allocation7 + $0x60] sm:$0xff]
        %v1419 = vld [vmem:[#allocation7 + $0x68] sm:$0xff]
        %v1420 = vld [vmem:[#allocation7 + $0x70] sm:$0xff]
        %v1421 = vld [vmem:[#allocation7 + $0x78] sm:$0xff]
        %v1422 = vpack.c.bf16 %v1407, %v1406
        %v1423 = vpack.c.bf16 %v1409, %v1408
        %v1424 = vpack.c.bf16 %v1411, %v1410
        %v1425 = vpack.c.bf16 %v1413, %v1412
        %v1426 = vpack.c.bf16 %v1415, %v1414
        %v1427 = vpack.c.bf16 %v1417, %v1416
        %v1428 = vpack.c.bf16 %v1419, %v1418
        %v1429 = vpack.c.bf16 %v1421, %v1420
        %v1430 = vld [vmem:[%s8] sm:$0x1]
        %v1432 = vlaneseq
        %v1433 = vshrl.u32 %v1432, 7
        %v1434 = vsub.s32 0, %v1433
        %v1435 = vrot.slane %v1430, %v1434
        %v1445 = vunpack.c.l.b16 %v1398
        %v1446 = vunpack.c.l.b16 %v1399
        %v1447 = vunpack.c.l.b16 %v1400
        %v1448 = vunpack.c.l.b16 %v1401
        %v1449 = vunpack.c.l.b16 %v1402
        %v1450 = vunpack.c.l.b16 %v1403
        %v1451 = vunpack.c.l.b16 %v1404
        %v1452 = vunpack.c.l.b16 %v1405
        %vm1453 = vcmask 1041409
        %v1454 = vsel %vm1453, %v1446, %v1445
        %vm1455 = vcmask 1042434
        %v1456 = vsel %vm1455, %v1447, %v1454
        %vm1457 = vcmask 1043459
        %v1458 = vsel %vm1457, %v1448, %v1456
        %vm1459 = vcmask 1044484
        %v1460 = vsel %vm1459, %v1449, %v1458
        %vm1461 = vcmask 1045509
        %v1462 = vsel %vm1461, %v1450, %v1460
        %vm1463 = vcmask 1046534
        %v1464 = vsel %vm1463, %v1451, %v1462
        %vm1465 = vcmask 1047559
        %v1466 = vsel %vm1465, %v1452, %v1464
        %v1467 = vpack.c.b16 %v1466, %v1466
        %1469 = vmatprep.subr.bf16.mxu0 0
        %1470 = vmatpush1.bf16.msra.mxu0 %v1422
        %1471 = vmatprep.subr.bf16.mxu0 0
        %1472 = vmatpush1.bf16.msra.mxu0 %v1423
        %1473 = vmatprep.subr.bf16.mxu0 0
        %1474 = vmatpush1.bf16.msra.mxu0 %v1424
        %1475 = vmatprep.subr.bf16.mxu0 0
        %1476 = vmatpush1.bf16.msra.mxu0 %v1425
        %1477 = vmatprep.subr.bf16.mxu0 0
        %1478 = vmatpush1.bf16.msra.mxu0 %v1426
        %1479 = vmatprep.subr.bf16.mxu0 0
        %1480 = vmatpush1.bf16.msra.mxu0 %v1427
        %1481 = vmatprep.subr.bf16.mxu0 0
        %1482 = vmatpush1.bf16.msra.mxu0 %v1428
        %1483 = vmatprep.subr.bf16.mxu0 0
        %1484 = vmatpush1.bf16.msra.mxu0 %v1429
        %1485 = vmatprep.subr.bf16.mxu0 0
        %1486 = vmatpush1.bf16.msra.mxu0 0
        %1487 = vmatprep.subr.bf16.mxu0 0
        %1488 = vmatpush1.bf16.msra.mxu0 0
        %1489 = vmatprep.subr.bf16.mxu0 0
        %1490 = vmatpush1.bf16.msra.mxu0 0
        %1491 = vmatprep.subr.bf16.mxu0 0
        %1492 = vmatpush1.bf16.msra.mxu0 0
        %1493 = vmatprep.subr.bf16.mxu0 0
        %1494 = vmatpush1.bf16.msra.mxu0 0
        %1495 = vmatprep.subr.bf16.mxu0 0
        %1496 = vmatpush1.bf16.msra.mxu0 0
        %1497 = vmatprep.subr.bf16.mxu0 0
        %1498 = vmatpush1.bf16.msra.mxu0 0
        %1499 = vmatprep.subr.bf16.mxu0 0
        %1500 = vmatpush1.bf16.msra.mxu0 0
        %1501 = vmatprep.mubr.bf16.mxu0 0
        %1502 = vmatmul.mubr.bf16.gmra.mrb[0].mxu0 %v1467
        %v1503 = vpop.f32.mrb[0].mxu0
        %v1504 = vadd.f32 %v1435, %v1503
        %v1505 = vpop.f32.mrb[0].mxu0
        %v1506 = vpop.f32.mrb[0].mxu0
        %v1507 = vpop.f32.mrb[0].mxu0
        %1508 = vdwg.mxu0
        %1509 = vst [vmem:[%s404] sm:$0xff] %v1504
        %s1510 = sand.u32 %s237, 1
        %s1511 = scalar_lea.sflag [#allocation4], %s1510
        %s1512 = sand.u32 %s237, 1
        %s1513 = smul.addr %s1512, 8
        %s1514 = scalar_lea.vmem [#allocation8], %s1513
        // Predicated region
        $region69: #{tpu_custom_call.1} parent=55 // pred_check
          %p1515 = pneg %p247
        $region70: #{tpu_custom_call.1} parent=55 // pred_check_branch
          %1517 = sbr.rel (%p1515) target = $region72
        $region71: #{tpu_custom_call.1} parent=55 // pred_region
          %s1519 = ssub.s32 128, 128
          %1520 = vsyncadd %s1511, %s1519
          %s1521 = smul.addr %s25, 128
          %s1522 = scalar_lea.hbm %s9, %s1521
          %s1524 = sshll.u32 %s1514, 4
          %s1525 = int_to_ptr.vmem [resolvable:$true] %s1524
          %1527 = dma.vmem_to_hbm [thread:$0]  %s1525, 128, %s1522, %s1511
        $region72: #{tpu_custom_call.1} parent=55 // pred_fallthru
          _
      $region56: #{tpu_custom_call.1} parent=5 // pred_fallthru
        _
      %p1528 = scmp.le.s32.totalorder 2, %s20
      // Predicated region
      $region73: #{tpu_custom_call.1} parent=5 // pred_check
        %p1529 = pneg %p1528
      $region74: #{tpu_custom_call.1} parent=5 // pred_check_branch
        %1531 = sbr.rel (%p1529) target = $region76
      $region75: #{tpu_custom_call.1} parent=5 // pred_region
        %s1532 = ssub.s32 %s20, 2
        // Predicated region
        $region77: #{tpu_custom_call.1} parent=75 // pred_check
          %p1533 = pneg %p253
        $region78: #{tpu_custom_call.1} parent=75 // pred_check_branch
          %1535 = sbr.rel (%p1533) target = $region80
        $region79: #{tpu_custom_call.1} parent=75 // pred_region
          %s1536 = sand.u32 %s238, 1
          %s1537 = scalar_lea.sflag [#allocation4], %s1536
          %s1538 = sand.u32 %s238, 1
          %s1539 = smul.addr %s1538, 8
          %s1540 = scalar_lea.vmem [#allocation8], %s1539
          %1541 = dma.done %s1537, 128
        $region80: #{tpu_custom_call.1} parent=75 // pred_fallthru
          _
      $region76: #{tpu_custom_call.1} parent=5 // pred_fallthru
        _
    $region6: #{tpu_custom_call.1} parent=1 // loop_footer
      %s24 = sadd.s32 1, %s20
    $region7: #{tpu_custom_call.1} parent=1 // loop_footer_branch
      %19 = sbr.rel target = $region3
    $region8: #{tpu_custom_call.1} parent=1 // loop_exit
      _
    %1542 = vsyncpa [#allocation3], 1
    %s1543 = scalar_lea.sflag [#allocation3], 1
    %1544 = vsyncpa %s1543, 1
    %1545 = vsyncpa [#allocation6], 1
    %1546 = vsyncpa [#allocation4], 1
    %s1547 = scalar_lea.sflag [#allocation4], 1
    %1548 = vsyncpa %s1547, 1

</llo_original>
